<compile_context>
chip_gen: v7x
topology: tpu7x:2x2x1
jax: 0.10.0
libtpu: 0.0.40
codegen_flags: <defaults>
</compile_context>

<pallas_src>
import functools

import jax
import jax.numpy as jnp
from jax import lax
from jax.experimental import pallas as pl
from jax.experimental.pallas import tpu as pltpu


# ----------------------------- activations ----------------------------------
def _apply_act(y, act):
    if act == "relu":
        return jnp.maximum(y, 0.0)
    if act == "relu6":
        return jnp.clip(y, 0.0, 6.0)
    if act == "leakyrelu":
        return jnp.where(y >= 0.0, y, 0.01 * y)
    if act == "hardswish":
        return y * jnp.clip(y + 3.0, 0.0, 6.0) * (1.0 / 6.0)
    raise NotImplementedError(f"act={act}")


def _round_up(x, m):
    return (x + m - 1) // m * m


# ------------------------------- kernel --------------------------------------
def _conv3x3_stage(x_f32, w_ref, scale, bias, mask, *, act, Wp, mxu_dtype):
    """One ConvModule (3x3 conv, stride 1, pad 1, folded BN, activation).

    x_f32: (Cin, L) f32, zero halo + zero lane tail, channel-first, images
           flattened along the lane axis.
    w_ref: (3, Cout, 3*Cin) ref; within each row group taps are ordered
           (kw, ci).
    scale/bias: (Cout, 1) f32 folded BN.   mask: (1, L) f32 interior mask.
    Returns (Cout, L) f32 with zeroed halo (valid padded input for the next
    stage).
    """
    L = x_f32.shape[-1]
    acc = None
    for g, dh in enumerate((-1, 0, 1)):            # one matmul per kernel row
        taps = []
        for dw in (-1, 0, 1):
            s = dh * Wp + dw                       # flat offset of this tap
            taps.append(x_f32 if s == 0
                        else pltpu.roll(x_f32, shift=(-s) % L, axis=1))
        col = jnp.concatenate(taps, axis=0).astype(mxu_dtype)   # (3*Cin, L)
        part = jnp.dot(w_ref[g], col, preferred_element_type=jnp.float32)
        acc = part if acc is None else acc + part
    y = _apply_act(acc * scale + bias, act)
    return y * mask                                # zero halo for next stage


def merged_head_kernel(x_ref, w1_ref, s1_ref, b1_ref, w2_ref, s2_ref, b2_ref,
                       w3_ref, b3_ref, mask_ref, o_ref, *, act, Wp, mxu_dtype):
    # x_ref:  (Cin_p, Lb)   padded+flattened images for this grid step
    # o_ref:  (Cout_p, Lb)  padded+flattened output (interior sliced by wrapper)
    x = x_ref[...].astype(jnp.float32)
    mask = mask_ref[...]                           # (1, Lb)

    y1 = _conv3x3_stage(x, w1_ref, s1_ref[...], b1_ref[...], mask,
                        act=act, Wp=Wp, mxu_dtype=mxu_dtype)
    y2 = _conv3x3_stage(y1, w2_ref, s2_ref[...], b2_ref[...], mask,
                        act=act, Wp=Wp, mxu_dtype=mxu_dtype)
    out = jnp.dot(w3_ref[...], y2.astype(mxu_dtype),
                  preferred_element_type=jnp.float32) + b3_ref[...]
    o_ref[...] = out.astype(o_ref.dtype)


# ------------------------------- wrapper --------------------------------------
def merged_head_forward(x_nchw, params, act="relu", *,
                        mxu_dtype=jnp.bfloat16, images_per_block=None):
    """MergedHead forward.  x_nchw: (N, C, H, W) f32 -> (N, out_ch, H, W) f32."""
    N, Cin, H, W = x_nchw.shape
    Hp, Wp = H + 2, W + 2
    L = _round_up(Hp * Wp, 128)                    # flat length, lane-rounded
    Cmid = params["w1"].shape[-1]
    Cout = params["w3"].shape[-1]
    Cin_p, Cmid_p, Cout_p = (_round_up(c, 8) for c in (Cin, Cmid, Cout))

    if images_per_block is None:
        # >=2 grid steps when possible (keeps both v7x TensorCores busy),
        # otherwise fold the whole batch into a single lane-dense block.
        images_per_block = N // 2 if (N % 2 == 0 and N >= 2) else N
    assert N % images_per_block == 0
    n_steps = N // images_per_block
    Lb = images_per_block * L

    # ---- layout prep (once, on the raw input / tiny weights) ---------------
    xp = jnp.pad(x_nchw, ((0, 0), (0, Cin_p - Cin), (1, 1), (1, 1)))
    xp = xp.reshape(N, Cin_p, Hp * Wp)
    xp = jnp.pad(xp, ((0, 0), (0, 0), (0, L - Hp * Wp)))
    x_flat = jnp.transpose(xp, (1, 0, 2)).reshape(Cin_p, N * L).astype(mxu_dtype)

    def conv_w(w_hwio, ci_p, co_p):                # (3,3,Ci,Co) -> (3, Co_p, 3*Ci_p)
        kh, kw, ci, co = w_hwio.shape
        w = jnp.pad(w_hwio, ((0, 0), (0, 0), (0, ci_p - ci), (0, co_p - co)))
        w = jnp.transpose(w, (0, 3, 1, 2))         # (kh, co, kw, ci)
        return w.reshape(kh, co_p, kw * ci_p).astype(mxu_dtype)

    def col_vec(v, c_p):
        return jnp.pad(v, (0, c_p - v.shape[0])).reshape(c_p, 1).astype(jnp.float32)

    w1 = conv_w(params["w1"], Cin_p, Cmid_p)
    w2 = conv_w(params["w2"], Cmid_p, Cmid_p)
    s1, b1 = col_vec(params["scale1"], Cmid_p), col_vec(params["bias1"], Cmid_p)
    s2, b2 = col_vec(params["scale2"], Cmid_p), col_vec(params["bias2"], Cmid_p)
    w3 = jnp.pad(params["w3"].T,
                 ((0, Cout_p - Cout), (0, Cmid_p - Cmid))).astype(mxu_dtype)
    b3 = col_vec(params["b3"], Cout_p)

    mask2d = jnp.zeros((Hp, Wp), jnp.float32).at[1:H + 1, 1:W + 1].set(1.0)
    mask = jnp.pad(mask2d.reshape(1, Hp * Wp), ((0, 0), (0, L - Hp * Wp)))
    mask = jnp.tile(mask, (1, images_per_block))   # (1, Lb), same every step

    def full(a):                                   # whole (tiny) array resident
        zeros = (0,) * a.ndim
        return pl.BlockSpec(a.shape, lambda n, z=zeros: z)

    # VMEM budget: double-buffered I/O blocks + live intermediates + margin,
    # clamped to be safe on v7x (64 MiB physical) and to lift v5e's 16 MiB default.
    esz = jnp.dtype(mxu_dtype).itemsize
    blk_bytes = 2 * (Cin_p * Lb * esz + Cout_p * Lb * 4)
    live_bytes = 2 * (3 * Cin_p + 2 * Cmid_p + Cout_p) * Lb * 4
    vmem_limit = int(min(max(blk_bytes + live_bytes + (4 << 20), 16 << 20), 48 << 20))

    kernel = functools.partial(merged_head_kernel, act=act, Wp=Wp,
                               mxu_dtype=mxu_dtype)
    out_flat = pl.pallas_call(
        kernel,
        out_shape=jax.ShapeDtypeStruct((Cout_p, N * L), jnp.float32),
        grid=(n_steps,),
        in_specs=[
            pl.BlockSpec((Cin_p, Lb), lambda n: (0, n)),
            full(w1), full(s1), full(b1),
            full(w2), full(s2), full(b2),
            full(w3), full(b3), full(mask),
        ],
        out_specs=pl.BlockSpec((Cout_p, Lb), lambda n: (0, n)),
        compiler_params=pltpu.CompilerParams(
            dimension_semantics=("parallel",),
            vmem_limit_bytes=vmem_limit,
        ),
    )(x_flat, w1, s1, b1, w2, s2, b2, w3, b3, mask)

    # Epilogue: un-flatten, drop halo / lane tail / padded output channels.
    # TODO(synk): at W >= 128 switch to a (C, Hp, Wp128) in-kernel layout so
    # this becomes one contiguous slice (dh taps become cheap sublane rolls).
    out = out_flat.reshape(Cout_p, N, L)[:, :, :Hp * Wp]
    out = out.reshape(Cout_p, N, Hp, Wp)[:Cout, :, 1:H + 1, 1:W + 1]
    return jnp.transpose(out, (1, 0, 2, 3))


# --------------------------- reference (plain JAX) ----------------------------
def merged_head_reference(x_nchw, params, act="relu"):
    dn = ("NCHW", "HWIO", "NCHW")
    prec = lax.Precision.HIGHEST

    def block(x, w, scale, bias):
        y = lax.conv_general_dilated(x, w, window_strides=(1, 1),
                                     padding="SAME", dimension_numbers=dn,
                                     precision=prec)
        y = y * scale.reshape(1, -1, 1, 1) + bias.reshape(1, -1, 1, 1)
        return _apply_act(y, act)

    y = block(x_nchw, params["w1"], params["scale1"], params["bias1"])
    y = block(y, params["w2"], params["scale2"], params["bias2"])
    y = jnp.einsum("nchw,cd->ndhw", y, params["w3"], precision=prec)
    return y + params["b3"].reshape(1, -1, 1, 1)


# -------------------------------- params --------------------------------------
def init_params(key, w_ch, out_channels):
    ks = jax.random.split(key, 12)
    eps = 1e-5

    def bn_fold(kg, kb, km, kv, c):                # eval-mode BN folding
        gamma = 1.0 + 0.1 * jax.random.normal(kg, (c,), jnp.float32)
        beta = 0.1 * jax.random.normal(kb, (c,), jnp.float32)
        mean = 0.1 * jax.random.normal(km, (c,), jnp.float32)
        var = jnp.abs(jax.random.normal(kv, (c,), jnp.float32)) + 0.5
        scale = gamma / jnp.sqrt(var + eps)
        return scale, beta - mean * scale

    scale1, bias1 = bn_fold(ks[0], ks[1], ks[2], ks[3], w_ch)
    scale2, bias2 = bn_fold(ks[4], ks[5], ks[6], ks[7], w_ch)
    return {
        "w1": 0.1 * jax.random.normal(ks[8], (3, 3, w_ch, w_ch), jnp.float32),
        "scale1": scale1, "bias1": bias1,
        "w2": 0.1 * jax.random.normal(ks[9], (3, 3, w_ch, w_ch), jnp.float32),
        "scale2": scale2, "bias2": bias2,
        "w3": 0.1 * jax.random.normal(ks[10], (w_ch, out_channels), jnp.float32),
        "b3": 0.1 * jax.random.normal(ks[11], (out_channels,), jnp.float32),
    }


# ---------------------------------- main ---------------------------------------
if __name__ == "__main__":
    N, H, W_sp = 2, 16, 16
    w_ch = 8            # MergedHead width `w`
    out_channels = 4
    act = "relu"

    key = jax.random.PRNGKey(0)
    kx, kp = jax.random.split(key)
    x = jax.random.normal(kx, (N, w_ch, H, W_sp), jnp.float32)   # NCHW
    params = init_params(kp, w_ch, out_channels)

    ref = merged_head_reference(x, params, act=act)

    # Tight check with the f32-MXU path (exact math path).
    out_f32 = jax.block_until_ready(
        jax.jit(functools.partial(merged_head_forward, act=act,
                                  mxu_dtype=jnp.float32))(x, params))
    assert out_f32.shape == (N, out_channels, H, W_sp), out_f32.shape
    assert jnp.allclose(out_f32, ref, atol=2e-3, rtol=2e-3), (
        float(jnp.max(jnp.abs(out_f32 - ref)))
    )

    # Production bf16-MXU path (f32 accumulation; bf16-level tolerance).
    out_bf16 = jax.block_until_ready(
        jax.jit(functools.partial(merged_head_forward, act=act,
                                  mxu_dtype=jnp.bfloat16))(x, params))
    assert out_bf16.shape == (N, out_channels, H, W_sp), out_bf16.shape
    assert jnp.allclose(out_bf16, ref, atol=5e-2, rtol=5e-2), (
        float(jnp.max(jnp.abs(out_bf16 - ref)))
    )

    print("KERNEL_OK")
</pallas_src>

<mosaic_0001>
module attributes {stable_mosaic.version = 11 : i64} {
  func.func @merged_head_kernel(%arg0: i32, %arg1: memref<8x384xf32, #tpu.memory_space<vmem>>, %arg2: memref<3x8x24xf32, #tpu.memory_space<vmem>>, %arg3: memref<8x1xf32, #tpu.memory_space<vmem>>, %arg4: memref<8x1xf32, #tpu.memory_space<vmem>>, %arg5: memref<3x8x24xf32, #tpu.memory_space<vmem>>, %arg6: memref<8x1xf32, #tpu.memory_space<vmem>>, %arg7: memref<8x1xf32, #tpu.memory_space<vmem>>, %arg8: memref<8x8xf32, #tpu.memory_space<vmem>>, %arg9: memref<8x1xf32, #tpu.memory_space<vmem>>, %arg10: memref<1x384xf32, #tpu.memory_space<vmem>>, %arg11: memref<8x384xf32, #tpu.memory_space<vmem>>) attributes {dimension_semantics = [#tpu.dimension_semantics<parallel>], iteration_bounds = array<i64: 2>, scalar_prefetch = 0 : i64, scratch_operands = 0 : i64, tpu.core_type = #tpu.core_type<tc>, window_params = [{transform_indices = @transform_0, window_bounds = array<i64: 8, 384>}, {pipeline_mode = #tpu.pipeline_mode<synchronous>, transform_indices = @transform_1, window_bounds = array<i64: 3, 8, 24>}, {pipeline_mode = #tpu.pipeline_mode<synchronous>, transform_indices = @transform_2, window_bounds = array<i64: 8, 1>}, {pipeline_mode = #tpu.pipeline_mode<synchronous>, transform_indices = @transform_3, window_bounds = array<i64: 8, 1>}, {pipeline_mode = #tpu.pipeline_mode<synchronous>, transform_indices = @transform_4, window_bounds = array<i64: 3, 8, 24>}, {pipeline_mode = #tpu.pipeline_mode<synchronous>, transform_indices = @transform_5, window_bounds = array<i64: 8, 1>}, {pipeline_mode = #tpu.pipeline_mode<synchronous>, transform_indices = @transform_6, window_bounds = array<i64: 8, 1>}, {pipeline_mode = #tpu.pipeline_mode<synchronous>, transform_indices = @transform_7, window_bounds = array<i64: 8, 8>}, {pipeline_mode = #tpu.pipeline_mode<synchronous>, transform_indices = @transform_8, window_bounds = array<i64: 8, 1>}, {pipeline_mode = #tpu.pipeline_mode<synchronous>, transform_indices = @transform_9, window_bounds = array<i64: 1, 384>}, {transform_indices = @transform_10, window_bounds = array<i64: 8, 384>}]} {
    %c0 = arith.constant 0 : index
    %c0_0 = arith.constant 0 : index
    %0 = vector.load %arg1[%c0, %c0_0] : memref<8x384xf32, #tpu.memory_space<vmem>>, vector<8x384xf32>
    %c0_1 = arith.constant 0 : index
    %c0_2 = arith.constant 0 : index
    %1 = vector.load %arg10[%c0_1, %c0_2] : memref<1x384xf32, #tpu.memory_space<vmem>>, vector<1x384xf32>
    %c0_3 = arith.constant 0 : index
    %c0_4 = arith.constant 0 : index
    %2 = vector.load %arg3[%c0_3, %c0_4] : memref<8x1xf32, #tpu.memory_space<vmem>>, vector<8x1xf32>
    %c0_5 = arith.constant 0 : index
    %c0_6 = arith.constant 0 : index
    %3 = vector.load %arg4[%c0_5, %c0_6] : memref<8x1xf32, #tpu.memory_space<vmem>>, vector<8x1xf32>
    %c19_i32 = arith.constant 19 : i32
    %4 = tpu.dynamic_rotate %0 by %c19_i32 dim 1 : vector<8x384xf32>, i32 -> vector<8x384xf32>
    %c18_i32 = arith.constant 18 : i32
    %5 = tpu.dynamic_rotate %0 by %c18_i32 dim 1 : vector<8x384xf32>, i32 -> vector<8x384xf32>
    %c17_i32 = arith.constant 17 : i32
    %6 = tpu.dynamic_rotate %0 by %c17_i32 dim 1 : vector<8x384xf32>, i32 -> vector<8x384xf32>
    %7 = tpu.concatenate %4, %5, %6 in 0 : vector<8x384xf32>, vector<8x384xf32>, vector<8x384xf32> -> vector<24x384xf32>
    %c0_7 = arith.constant 0 : index
    %c0_8 = arith.constant 0 : index
    %c0_9 = arith.constant 0 : index
    %8 = vector.load %arg2[%c0_7, %c0_8, %c0_9] : memref<3x8x24xf32, #tpu.memory_space<vmem>>, vector<1x8x24xf32>
    %9 = vector.shape_cast %8 : vector<1x8x24xf32> to vector<8x24xf32>
    %cst = arith.constant dense<0.000000e+00> : vector<8x384xf32>
    %10 = tpu.matmul %9, %7, %cst {dimension_numbers = #tpu.dot_dimension_numbers<[1], [0], [0], [1], [0, 0, 1, 1], [], []>} : vector<8x24xf32>, vector<24x384xf32>, vector<8x384xf32> -> vector<8x384xf32>
    %c1_i32 = arith.constant 1 : i32
    %11 = tpu.dynamic_rotate %0 by %c1_i32 dim 1 : vector<8x384xf32>, i32 -> vector<8x384xf32>
    %c383_i32 = arith.constant 383 : i32
    %12 = tpu.dynamic_rotate %0 by %c383_i32 dim 1 : vector<8x384xf32>, i32 -> vector<8x384xf32>
    %13 = tpu.concatenate %11, %0, %12 in 0 : vector<8x384xf32>, vector<8x384xf32>, vector<8x384xf32> -> vector<24x384xf32>
    %c1 = arith.constant 1 : index
    %c0_10 = arith.constant 0 : index
    %c0_11 = arith.constant 0 : index
    %14 = vector.load %arg2[%c1, %c0_10, %c0_11] : memref<3x8x24xf32, #tpu.memory_space<vmem>>, vector<1x8x24xf32>
    %15 = vector.shape_cast %14 : vector<1x8x24xf32> to vector<8x24xf32>
    %cst_12 = arith.constant dense<0.000000e+00> : vector<8x384xf32>
    %16 = tpu.matmul %15, %13, %cst_12 {dimension_numbers = #tpu.dot_dimension_numbers<[1], [0], [0], [1], [0, 0, 1, 1], [], []>} : vector<8x24xf32>, vector<24x384xf32>, vector<8x384xf32> -> vector<8x384xf32>
    %17 = arith.addf %10, %16 : vector<8x384xf32>
    %c367_i32 = arith.constant 367 : i32
    %18 = tpu.dynamic_rotate %0 by %c367_i32 dim 1 : vector<8x384xf32>, i32 -> vector<8x384xf32>
    %c366_i32 = arith.constant 366 : i32
    %19 = tpu.dynamic_rotate %0 by %c366_i32 dim 1 : vector<8x384xf32>, i32 -> vector<8x384xf32>
    %c365_i32 = arith.constant 365 : i32
    %20 = tpu.dynamic_rotate %0 by %c365_i32 dim 1 : vector<8x384xf32>, i32 -> vector<8x384xf32>
    %21 = tpu.concatenate %18, %19, %20 in 0 : vector<8x384xf32>, vector<8x384xf32>, vector<8x384xf32> -> vector<24x384xf32>
    %c2 = arith.constant 2 : index
    %c0_13 = arith.constant 0 : index
    %c0_14 = arith.constant 0 : index
    %22 = vector.load %arg2[%c2, %c0_13, %c0_14] : memref<3x8x24xf32, #tpu.memory_space<vmem>>, vector<1x8x24xf32>
    %23 = vector.shape_cast %22 : vector<1x8x24xf32> to vector<8x24xf32>
    %cst_15 = arith.constant dense<0.000000e+00> : vector<8x384xf32>
    %24 = tpu.matmul %23, %21, %cst_15 {dimension_numbers = #tpu.dot_dimension_numbers<[1], [0], [0], [1], [0, 0, 1, 1], [], []>} : vector<8x24xf32>, vector<24x384xf32>, vector<8x384xf32> -> vector<8x384xf32>
    %25 = arith.addf %17, %24 : vector<8x384xf32>
    %26 = vector.broadcast %2 : vector<8x1xf32> to vector<8x384xf32>
    %27 = arith.mulf %25, %26 : vector<8x384xf32>
    %28 = vector.broadcast %3 : vector<8x1xf32> to vector<8x384xf32>
    %29 = arith.addf %27, %28 : vector<8x384xf32>
    %cst_16 = arith.constant 0.000000e+00 : f32
    %30 = vector.broadcast %cst_16 : f32 to vector<8x384xf32>
    %31 = arith.maximumf %29, %30 : vector<8x384xf32>
    %32 = vector.broadcast %1 : vector<1x384xf32> to vector<8x384xf32>
    %33 = arith.mulf %31, %32 : vector<8x384xf32>
    %c0_17 = arith.constant 0 : index
    %c0_18 = arith.constant 0 : index
    %34 = vector.load %arg6[%c0_17, %c0_18] : memref<8x1xf32, #tpu.memory_space<vmem>>, vector<8x1xf32>
    %c0_19 = arith.constant 0 : index
    %c0_20 = arith.constant 0 : index
    %35 = vector.load %arg7[%c0_19, %c0_20] : memref<8x1xf32, #tpu.memory_space<vmem>>, vector<8x1xf32>
    %c19_i32_21 = arith.constant 19 : i32
    %36 = tpu.dynamic_rotate %33 by %c19_i32_21 dim 1 : vector<8x384xf32>, i32 -> vector<8x384xf32>
    %c18_i32_22 = arith.constant 18 : i32
    %37 = tpu.dynamic_rotate %33 by %c18_i32_22 dim 1 : vector<8x384xf32>, i32 -> vector<8x384xf32>
    %c17_i32_23 = arith.constant 17 : i32
    %38 = tpu.dynamic_rotate %33 by %c17_i32_23 dim 1 : vector<8x384xf32>, i32 -> vector<8x384xf32>
    %39 = tpu.concatenate %36, %37, %38 in 0 : vector<8x384xf32>, vector<8x384xf32>, vector<8x384xf32> -> vector<24x384xf32>
    %c0_24 = arith.constant 0 : index
    %c0_25 = arith.constant 0 : index
    %c0_26 = arith.constant 0 : index
    %40 = vector.load %arg5[%c0_24, %c0_25, %c0_26] : memref<3x8x24xf32, #tpu.memory_space<vmem>>, vector<1x8x24xf32>
    %41 = vector.shape_cast %40 : vector<1x8x24xf32> to vector<8x24xf32>
    %cst_27 = arith.constant dense<0.000000e+00> : vector<8x384xf32>
    %42 = tpu.matmul %41, %39, %cst_27 {dimension_numbers = #tpu.dot_dimension_numbers<[1], [0], [0], [1], [0, 0, 1, 1], [], []>} : vector<8x24xf32>, vector<24x384xf32>, vector<8x384xf32> -> vector<8x384xf32>
    %c1_i32_28 = arith.constant 1 : i32
    %43 = tpu.dynamic_rotate %33 by %c1_i32_28 dim 1 : vector<8x384xf32>, i32 -> vector<8x384xf32>
    %c383_i32_29 = arith.constant 383 : i32
    %44 = tpu.dynamic_rotate %33 by %c383_i32_29 dim 1 : vector<8x384xf32>, i32 -> vector<8x384xf32>
    %45 = tpu.concatenate %43, %33, %44 in 0 : vector<8x384xf32>, vector<8x384xf32>, vector<8x384xf32> -> vector<24x384xf32>
    %c1_30 = arith.constant 1 : index
    %c0_31 = arith.constant 0 : index
    %c0_32 = arith.constant 0 : index
    %46 = vector.load %arg5[%c1_30, %c0_31, %c0_32] : memref<3x8x24xf32, #tpu.memory_space<vmem>>, vector<1x8x24xf32>
    %47 = vector.shape_cast %46 : vector<1x8x24xf32> to vector<8x24xf32>
    %cst_33 = arith.constant dense<0.000000e+00> : vector<8x384xf32>
    %48 = tpu.matmul %47, %45, %cst_33 {dimension_numbers = #tpu.dot_dimension_numbers<[1], [0], [0], [1], [0, 0, 1, 1], [], []>} : vector<8x24xf32>, vector<24x384xf32>, vector<8x384xf32> -> vector<8x384xf32>
    %49 = arith.addf %42, %48 : vector<8x384xf32>
    %c367_i32_34 = arith.constant 367 : i32
    %50 = tpu.dynamic_rotate %33 by %c367_i32_34 dim 1 : vector<8x384xf32>, i32 -> vector<8x384xf32>
    %c366_i32_35 = arith.constant 366 : i32
    %51 = tpu.dynamic_rotate %33 by %c366_i32_35 dim 1 : vector<8x384xf32>, i32 -> vector<8x384xf32>
    %c365_i32_36 = arith.constant 365 : i32
    %52 = tpu.dynamic_rotate %33 by %c365_i32_36 dim 1 : vector<8x384xf32>, i32 -> vector<8x384xf32>
    %53 = tpu.concatenate %50, %51, %52 in 0 : vector<8x384xf32>, vector<8x384xf32>, vector<8x384xf32> -> vector<24x384xf32>
    %c2_37 = arith.constant 2 : index
    %c0_38 = arith.constant 0 : index
    %c0_39 = arith.constant 0 : index
    %54 = vector.load %arg5[%c2_37, %c0_38, %c0_39] : memref<3x8x24xf32, #tpu.memory_space<vmem>>, vector<1x8x24xf32>
    %55 = vector.shape_cast %54 : vector<1x8x24xf32> to vector<8x24xf32>
    %cst_40 = arith.constant dense<0.000000e+00> : vector<8x384xf32>
    %56 = tpu.matmul %55, %53, %cst_40 {dimension_numbers = #tpu.dot_dimension_numbers<[1], [0], [0], [1], [0, 0, 1, 1], [], []>} : vector<8x24xf32>, vector<24x384xf32>, vector<8x384xf32> -> vector<8x384xf32>
    %57 = arith.addf %49, %56 : vector<8x384xf32>
    %58 = vector.broadcast %34 : vector<8x1xf32> to vector<8x384xf32>
    %59 = arith.mulf %57, %58 : vector<8x384xf32>
    %60 = vector.broadcast %35 : vector<8x1xf32> to vector<8x384xf32>
    %61 = arith.addf %59, %60 : vector<8x384xf32>
    %cst_41 = arith.constant 0.000000e+00 : f32
    %62 = vector.broadcast %cst_41 : f32 to vector<8x384xf32>
    %63 = arith.maximumf %61, %62 : vector<8x384xf32>
    %64 = vector.broadcast %1 : vector<1x384xf32> to vector<8x384xf32>
    %65 = arith.mulf %63, %64 : vector<8x384xf32>
    %c0_42 = arith.constant 0 : index
    %c0_43 = arith.constant 0 : index
    %66 = vector.load %arg8[%c0_42, %c0_43] : memref<8x8xf32, #tpu.memory_space<vmem>>, vector<8x8xf32>
    %cst_44 = arith.constant dense<0.000000e+00> : vector<8x384xf32>
    %67 = tpu.matmul %66, %65, %cst_44 {dimension_numbers = #tpu.dot_dimension_numbers<[1], [0], [0], [1], [0, 0, 1, 1], [], []>} : vector<8x8xf32>, vector<8x384xf32>, vector<8x384xf32> -> vector<8x384xf32>
    %c0_45 = arith.constant 0 : index
    %c0_46 = arith.constant 0 : index
    %68 = vector.load %arg9[%c0_45, %c0_46] : memref<8x1xf32, #tpu.memory_space<vmem>>, vector<8x1xf32>
    %69 = vector.broadcast %68 : vector<8x1xf32> to vector<8x384xf32>
    %70 = arith.addf %67, %69 : vector<8x384xf32>
    %c0_47 = arith.constant 0 : index
    %c0_48 = arith.constant 0 : index
    %71 = vector.load %arg11[%c0_47, %c0_48] : memref<8x384xf32, #tpu.memory_space<vmem>>, vector<8x384xf32>
    tpu.vector_store %arg11[%c0_47, %c0_48], %70 {strides = array<i32>} : memref<8x384xf32, #tpu.memory_space<vmem>>, vector<8x384xf32>,
    return
  }
  func.func @transform_0(%arg0: i32) -> (i32, i32) {
    %c0_i32 = arith.constant 0 : i32
    %c0_i32_0 = arith.constant 0 : i32
    return %c0_i32, %arg0 : i32, i32
  }
  func.func @transform_1(%arg0: i32) -> (i32, i32, i32) {
    %c0_i32 = arith.constant 0 : i32
    %c0_i32_0 = arith.constant 0 : i32
    %c0_i32_1 = arith.constant 0 : i32
    %c0_i32_2 = arith.constant 0 : i32
    return %c0_i32, %c0_i32_0, %c0_i32_1 : i32, i32, i32
  }
  func.func @transform_2(%arg0: i32) -> (i32, i32) {
    %c0_i32 = arith.constant 0 : i32
    %c0_i32_0 = arith.constant 0 : i32
    %c0_i32_1 = arith.constant 0 : i32
    return %c0_i32, %c0_i32_0 : i32, i32
  }
  func.func @transform_3(%arg0: i32) -> (i32, i32) {
    %c0_i32 = arith.constant 0 : i32
    %c0_i32_0 = arith.constant 0 : i32
    %c0_i32_1 = arith.constant 0 : i32
    return %c0_i32, %c0_i32_0 : i32, i32
  }
  func.func @transform_4(%arg0: i32) -> (i32, i32, i32) {
    %c0_i32 = arith.constant 0 : i32
    %c0_i32_0 = arith.constant 0 : i32
    %c0_i32_1 = arith.constant 0 : i32
    %c0_i32_2 = arith.constant 0 : i32
    return %c0_i32, %c0_i32_0, %c0_i32_1 : i32, i32, i32
  }
  func.func @transform_5(%arg0: i32) -> (i32, i32) {
    %c0_i32 = arith.constant 0 : i32
    %c0_i32_0 = arith.constant 0 : i32
    %c0_i32_1 = arith.constant 0 : i32
    return %c0_i32, %c0_i32_0 : i32, i32
  }
  func.func @transform_6(%arg0: i32) -> (i32, i32) {
    %c0_i32 = arith.constant 0 : i32
    %c0_i32_0 = arith.constant 0 : i32
    %c0_i32_1 = arith.constant 0 : i32
    return %c0_i32, %c0_i32_0 : i32, i32
  }
  func.func @transform_7(%arg0: i32) -> (i32, i32) {
    %c0_i32 = arith.constant 0 : i32
    %c0_i32_0 = arith.constant 0 : i32
    %c0_i32_1 = arith.constant 0 : i32
    return %c0_i32, %c0_i32_0 : i32, i32
  }
  func.func @transform_8(%arg0: i32) -> (i32, i32) {
    %c0_i32 = arith.constant 0 : i32
    %c0_i32_0 = arith.constant 0 : i32
    %c0_i32_1 = arith.constant 0 : i32
    return %c0_i32, %c0_i32_0 : i32, i32
  }
  func.func @transform_9(%arg0: i32) -> (i32, i32) {
    %c0_i32 = arith.constant 0 : i32
    %c0_i32_0 = arith.constant 0 : i32
    %c0_i32_1 = arith.constant 0 : i32
    return %c0_i32, %c0_i32_0 : i32, i32
  }
  func.func @transform_10(%arg0: i32) -> (i32, i32) {
    %c0_i32 = arith.constant 0 : i32
    %c0_i32_0 = arith.constant 0 : i32
    return %c0_i32, %arg0 : i32, i32
  }
}

</mosaic_0001>

<llo_original>
// kernel: merged_head_forward.1
$region0: #{merged_head_forward.1}
  #allocation0 [shape = 'u32[]', space=smem, size = 0x4, offset = 0x4, fixed_abs, tag = 'smem constant byte address 0x4 - core index']
  #allocation1 [shape = 'u32[144,128]{1,0:T(1,128)}', space=vmem, size = 0x12000, scoped, tag = 'internal scratch']
  %s0 = inlined_call_operand.vmem [shape: f32[8,768], index: 0, kind: input, shape index: {}]
  %s1 = inlined_call_operand.vmem [shape: f32[3,8,24], index: 1, kind: input, shape index: {}]
  %s2 = inlined_call_operand.vmem [shape: f32[8,1], index: 2, kind: input, shape index: {}]
  %s3 = inlined_call_operand.vmem [shape: f32[8,1], index: 3, kind: input, shape index: {}]
  %s4 = inlined_call_operand.vmem [shape: f32[3,8,24], index: 4, kind: input, shape index: {}]
  %s5 = inlined_call_operand.vmem [shape: f32[8,1], index: 5, kind: input, shape index: {}]
  %s6 = inlined_call_operand.vmem [shape: f32[8,1], index: 6, kind: input, shape index: {}]
  %s7 = inlined_call_operand.vmem [shape: f32[8,8], index: 7, kind: input, shape index: {}]
  %s8 = inlined_call_operand.vmem [shape: f32[8,1], index: 8, kind: input, shape index: {}]
  %s9 = inlined_call_operand.vmem [shape: f32[1,384], index: 9, kind: input, shape index: {}]
  %s10 = inlined_call_operand.vmem [shape: f32[8,768], index: 10, kind: output, shape index: {}]
  %s11 = sld [smem:[#allocation0]]
  $region73: #{merged_head_forward.1} parent=0
    _
  %s13 = ssub.s32 1, %s11
  %s14 = scalar_select 0, %s13, %s11
  loop: start=0, step=1, limit=4
  $region2: #{merged_head_forward.1} parent=0 // loop_pre_header
    _
  $region3: #{merged_head_forward.1} parent=0 // loop_header
    %s16 = sphi 0, %s20
    %p17 = scmp.ge.s32.totalorder %s16, 4
    %s26 = sphi 0, %s28
    %s29 = sphi 0, %s26
    %s30 = sphi 0, %s29
    %s46 = sphi 0, %s30
    %s50 = sphi 0, %s50
    %s52 = sphi 0, %s50
    %s53 = sphi 0, %s52
    %s67 = sphi 0, %s53
    %s71 = sphi 0, %s71
    %s73 = sphi 0, %s71
    %s74 = sphi 0, %s73
    %s88 = sphi 0, %s74
    %s92 = sphi 0, %s92
    %s94 = sphi 0, %s92
    %s95 = sphi 0, %s94
    %s109 = sphi 0, %s95
    %s113 = sphi 0, %s113
    %s115 = sphi 0, %s113
    %s116 = sphi 0, %s115
    %s130 = sphi 0, %s116
    %s134 = sphi 0, %s134
    %s136 = sphi 0, %s134
    %s137 = sphi 0, %s136
    %s151 = sphi 0, %s137
    %s155 = sphi 0, %s155
    %s157 = sphi 0, %s155
    %s158 = sphi 0, %s157
    %s172 = sphi 0, %s158
    %s176 = sphi 0, %s176
    %s178 = sphi 0, %s176
    %s179 = sphi 0, %s178
    %s193 = sphi 0, %s179
    %s197 = sphi 0, %s197
    %s199 = sphi 0, %s197
    %s200 = sphi 0, %s199
    %s214 = sphi 0, %s200
    %s218 = sphi 0, %s218
    %s220 = sphi 0, %s218
    %s221 = sphi 0, %s220
    %s235 = sphi 0, %s221
    %s241 = sphi 0, %s243
    %s244 = sphi 0, %s241
    %s245 = sphi 0, %s244
    %s261 = sphi 0, %s245
  $region4: #{merged_head_forward.1} parent=0 // loop_header_branch
    %19 = sbr.rel (%p17) target = $region8
  $region5: #{merged_head_forward.1} parent=0 // loop_body
    %s21 = ssub.s32 %s16, 1
    %s22 = ssub.s32 %s16, 2
    %s23 = sadd.s32 %s16, 1
    %s24 = ssub.s32 %s16, %s23
    %p25 = scmp.eq.s32.totalorder %s24, 0
    %s27 = sadd.s32 %s26, 1
    %s28 = scalar_select %p25, %s26, %s27
    %p31 = pneg %p25
    %p32 = scmp.eq.s32.totalorder %s16, 1
    %p33 = por %p31, %p32
    %p34 = scmp.ne.s32.totalorder %s26, %s29
    %p35 = scmp.eq.s32.totalorder %s16, 0
    %p36 = por %p34, %p35
    %p37 = scmp.ne.s32.totalorder %s26, %s29
    %p38 = scmp.eq.s32.totalorder %s21, 1
    %p39 = por %p37, %p38
    %p40 = scmp.ne.s32.totalorder %s29, %s30
    %p41 = scmp.eq.s32.totalorder %s21, 0
    %p42 = por %p40, %p41
    %p43 = scmp.ne.s32.totalorder %s29, %s30
    %p44 = scmp.eq.s32.totalorder %s22, 1
    %p45 = por %p43, %p44
    %p47 = scmp.ne.s32.totalorder %s30, %s46
    %p48 = scmp.eq.s32.totalorder %s22, 0
    %p49 = por %p47, %p48
    %s51 = sadd.s32 %s50, 1
    %p54 = scmp.eq.s32.totalorder %s16, 1
    %p55 = scmp.ne.s32.totalorder %s50, %s52
    %p56 = scmp.eq.s32.totalorder %s16, 0
    %p57 = por %p55, %p56
    %p58 = scmp.ne.s32.totalorder %s50, %s52
    %p59 = scmp.eq.s32.totalorder %s21, 1
    %p60 = por %p58, %p59
    %p61 = scmp.ne.s32.totalorder %s52, %s53
    %p62 = scmp.eq.s32.totalorder %s21, 0
    %p63 = por %p61, %p62
    %p64 = scmp.ne.s32.totalorder %s52, %s53
    %p65 = scmp.eq.s32.totalorder %s22, 1
    %p66 = por %p64, %p65
    %p68 = scmp.ne.s32.totalorder %s53, %s67
    %p69 = scmp.eq.s32.totalorder %s22, 0
    %p70 = por %p68, %p69
    %s72 = sadd.s32 %s71, 1
    %p75 = scmp.eq.s32.totalorder %s16, 1
    %p76 = scmp.ne.s32.totalorder %s71, %s73
    %p77 = scmp.eq.s32.totalorder %s16, 0
    %p78 = por %p76, %p77
    %p79 = scmp.ne.s32.totalorder %s71, %s73
    %p80 = scmp.eq.s32.totalorder %s21, 1
    %p81 = por %p79, %p80
    %p82 = scmp.ne.s32.totalorder %s73, %s74
    %p83 = scmp.eq.s32.totalorder %s21, 0
    %p84 = por %p82, %p83
    %p85 = scmp.ne.s32.totalorder %s73, %s74
    %p86 = scmp.eq.s32.totalorder %s22, 1
    %p87 = por %p85, %p86
    %p89 = scmp.ne.s32.totalorder %s74, %s88
    %p90 = scmp.eq.s32.totalorder %s22, 0
    %p91 = por %p89, %p90
    %s93 = sadd.s32 %s92, 1
    %p96 = scmp.eq.s32.totalorder %s16, 1
    %p97 = scmp.ne.s32.totalorder %s92, %s94
    %p98 = scmp.eq.s32.totalorder %s16, 0
    %p99 = por %p97, %p98
    %p100 = scmp.ne.s32.totalorder %s92, %s94
    %p101 = scmp.eq.s32.totalorder %s21, 1
    %p102 = por %p100, %p101
    %p103 = scmp.ne.s32.totalorder %s94, %s95
    %p104 = scmp.eq.s32.totalorder %s21, 0
    %p105 = por %p103, %p104
    %p106 = scmp.ne.s32.totalorder %s94, %s95
    %p107 = scmp.eq.s32.totalorder %s22, 1
    %p108 = por %p106, %p107
    %p110 = scmp.ne.s32.totalorder %s95, %s109
    %p111 = scmp.eq.s32.totalorder %s22, 0
    %p112 = por %p110, %p111
    %s114 = sadd.s32 %s113, 1
    %p117 = scmp.eq.s32.totalorder %s16, 1
    %p118 = scmp.ne.s32.totalorder %s113, %s115
    %p119 = scmp.eq.s32.totalorder %s16, 0
    %p120 = por %p118, %p119
    %p121 = scmp.ne.s32.totalorder %s113, %s115
    %p122 = scmp.eq.s32.totalorder %s21, 1
    %p123 = por %p121, %p122
    %p124 = scmp.ne.s32.totalorder %s115, %s116
    %p125 = scmp.eq.s32.totalorder %s21, 0
    %p126 = por %p124, %p125
    %p127 = scmp.ne.s32.totalorder %s115, %s116
    %p128 = scmp.eq.s32.totalorder %s22, 1
    %p129 = por %p127, %p128
    %p131 = scmp.ne.s32.totalorder %s116, %s130
    %p132 = scmp.eq.s32.totalorder %s22, 0
    %p133 = por %p131, %p132
    %s135 = sadd.s32 %s134, 1
    %p138 = scmp.eq.s32.totalorder %s16, 1
    %p139 = scmp.ne.s32.totalorder %s134, %s136
    %p140 = scmp.eq.s32.totalorder %s16, 0
    %p141 = por %p139, %p140
    %p142 = scmp.ne.s32.totalorder %s134, %s136
    %p143 = scmp.eq.s32.totalorder %s21, 1
    %p144 = por %p142, %p143
    %p145 = scmp.ne.s32.totalorder %s136, %s137
    %p146 = scmp.eq.s32.totalorder %s21, 0
    %p147 = por %p145, %p146
    %p148 = scmp.ne.s32.totalorder %s136, %s137
    %p149 = scmp.eq.s32.totalorder %s22, 1
    %p150 = por %p148, %p149
    %p152 = scmp.ne.s32.totalorder %s137, %s151
    %p153 = scmp.eq.s32.totalorder %s22, 0
    %p154 = por %p152, %p153
    %s156 = sadd.s32 %s155, 1
    %p159 = scmp.eq.s32.totalorder %s16, 1
    %p160 = scmp.ne.s32.totalorder %s155, %s157
    %p161 = scmp.eq.s32.totalorder %s16, 0
    %p162 = por %p160, %p161
    %p163 = scmp.ne.s32.totalorder %s155, %s157
    %p164 = scmp.eq.s32.totalorder %s21, 1
    %p165 = por %p163, %p164
    %p166 = scmp.ne.s32.totalorder %s157, %s158
    %p167 = scmp.eq.s32.totalorder %s21, 0
    %p168 = por %p166, %p167
    %p169 = scmp.ne.s32.totalorder %s157, %s158
    %p170 = scmp.eq.s32.totalorder %s22, 1
    %p171 = por %p169, %p170
    %p173 = scmp.ne.s32.totalorder %s158, %s172
    %p174 = scmp.eq.s32.totalorder %s22, 0
    %p175 = por %p173, %p174
    %s177 = sadd.s32 %s176, 1
    %p180 = scmp.eq.s32.totalorder %s16, 1
    %p181 = scmp.ne.s32.totalorder %s176, %s178
    %p182 = scmp.eq.s32.totalorder %s16, 0
    %p183 = por %p181, %p182
    %p184 = scmp.ne.s32.totalorder %s176, %s178
    %p185 = scmp.eq.s32.totalorder %s21, 1
    %p186 = por %p184, %p185
    %p187 = scmp.ne.s32.totalorder %s178, %s179
    %p188 = scmp.eq.s32.totalorder %s21, 0
    %p189 = por %p187, %p188
    %p190 = scmp.ne.s32.totalorder %s178, %s179
    %p191 = scmp.eq.s32.totalorder %s22, 1
    %p192 = por %p190, %p191
    %p194 = scmp.ne.s32.totalorder %s179, %s193
    %p195 = scmp.eq.s32.totalorder %s22, 0
    %p196 = por %p194, %p195
    %s198 = sadd.s32 %s197, 1
    %p201 = scmp.eq.s32.totalorder %s16, 1
    %p202 = scmp.ne.s32.totalorder %s197, %s199
    %p203 = scmp.eq.s32.totalorder %s16, 0
    %p204 = por %p202, %p203
    %p205 = scmp.ne.s32.totalorder %s197, %s199
    %p206 = scmp.eq.s32.totalorder %s21, 1
    %p207 = por %p205, %p206
    %p208 = scmp.ne.s32.totalorder %s199, %s200
    %p209 = scmp.eq.s32.totalorder %s21, 0
    %p210 = por %p208, %p209
    %p211 = scmp.ne.s32.totalorder %s199, %s200
    %p212 = scmp.eq.s32.totalorder %s22, 1
    %p213 = por %p211, %p212
    %p215 = scmp.ne.s32.totalorder %s200, %s214
    %p216 = scmp.eq.s32.totalorder %s22, 0
    %p217 = por %p215, %p216
    %s219 = sadd.s32 %s218, 1
    %p222 = scmp.eq.s32.totalorder %s16, 1
    %p223 = scmp.ne.s32.totalorder %s218, %s220
    %p224 = scmp.eq.s32.totalorder %s16, 0
    %p225 = por %p223, %p224
    %p226 = scmp.ne.s32.totalorder %s218, %s220
    %p227 = scmp.eq.s32.totalorder %s21, 1
    %p228 = por %p226, %p227
    %p229 = scmp.ne.s32.totalorder %s220, %s221
    %p230 = scmp.eq.s32.totalorder %s21, 0
    %p231 = por %p229, %p230
    %p232 = scmp.ne.s32.totalorder %s220, %s221
    %p233 = scmp.eq.s32.totalorder %s22, 1
    %p234 = por %p232, %p233
    %p236 = scmp.ne.s32.totalorder %s221, %s235
    %p237 = scmp.eq.s32.totalorder %s22, 0
    %p238 = por %p236, %p237
    %s239 = ssub.s32 %s16, %s23
    %p240 = scmp.eq.s32.totalorder %s239, 0
    %s242 = sadd.s32 %s241, 1
    %s243 = scalar_select %p240, %s241, %s242
    %p246 = pneg %p240
    %p247 = scmp.eq.s32.totalorder %s16, 1
    %p248 = por %p246, %p247
    %p249 = scmp.ne.s32.totalorder %s241, %s244
    %p250 = scmp.eq.s32.totalorder %s16, 0
    %p251 = por %p249, %p250
    %p252 = scmp.ne.s32.totalorder %s241, %s244
    %p253 = scmp.eq.s32.totalorder %s21, 1
    %p254 = por %p252, %p253
    %p255 = scmp.ne.s32.totalorder %s244, %s245
    %p256 = scmp.eq.s32.totalorder %s21, 0
    %p257 = por %p255, %p256
    %p258 = scmp.ne.s32.totalorder %s244, %s245
    %p259 = scmp.eq.s32.totalorder %s22, 1
    %p260 = por %p258, %p259
    %p262 = scmp.ne.s32.totalorder %s245, %s261
    %p263 = scmp.eq.s32.totalorder %s22, 0
    %p264 = por %p262, %p263
    %p265 = scmp.le.s32.totalorder 1, %s16
    %p266 = scmp.lt.s32.totalorder %s16, 3
    %p267 = pnand %p265, %p266
    %p268 = pneg %p267
    // Predicated region
    $region9: #{merged_head_forward.1} parent=5 // pred_check
      _
    $region10: #{merged_head_forward.1} parent=5 // pred_check_branch
      %270 = sbr.rel (%p267) target = $region12
    $region11: #{merged_head_forward.1} parent=5 // pred_region
      %s271 = ssub.s32 %s16, 1
      // Predicated region
      $region13: #{merged_head_forward.1} parent=11 // pred_check
        %p272 = pneg %p63
      $region14: #{merged_head_forward.1} parent=11 // pred_check_branch
        %274 = sbr.rel (%p272) target = $region16
      $region15: #{merged_head_forward.1} parent=11 // pred_region
        _
      $region16: #{merged_head_forward.1} parent=11 // pred_fallthru
        _
      // Predicated region
      $region17: #{merged_head_forward.1} parent=11 // pred_check
        %p275 = pneg %p84
      $region18: #{merged_head_forward.1} parent=11 // pred_check_branch
        %277 = sbr.rel (%p275) target = $region20
      $region19: #{merged_head_forward.1} parent=11 // pred_region
        _
      $region20: #{merged_head_forward.1} parent=11 // pred_fallthru
        _
      // Predicated region
      $region21: #{merged_head_forward.1} parent=11 // pred_check
        %p278 = pneg %p105
      $region22: #{merged_head_forward.1} parent=11 // pred_check_branch
        %280 = sbr.rel (%p278) target = $region24
      $region23: #{merged_head_forward.1} parent=11 // pred_region
        _
      $region24: #{merged_head_forward.1} parent=11 // pred_fallthru
        _
      // Predicated region
      $region25: #{merged_head_forward.1} parent=11 // pred_check
        %p281 = pneg %p126
      $region26: #{merged_head_forward.1} parent=11 // pred_check_branch
        %283 = sbr.rel (%p281) target = $region28
      $region27: #{merged_head_forward.1} parent=11 // pred_region
        _
      $region28: #{merged_head_forward.1} parent=11 // pred_fallthru
        _
      // Predicated region
      $region29: #{merged_head_forward.1} parent=11 // pred_check
        %p284 = pneg %p147
      $region30: #{merged_head_forward.1} parent=11 // pred_check_branch
        %286 = sbr.rel (%p284) target = $region32
      $region31: #{merged_head_forward.1} parent=11 // pred_region
        _
      $region32: #{merged_head_forward.1} parent=11 // pred_fallthru
        _
      // Predicated region
      $region33: #{merged_head_forward.1} parent=11 // pred_check
        %p287 = pneg %p168
      $region34: #{merged_head_forward.1} parent=11 // pred_check_branch
        %289 = sbr.rel (%p287) target = $region36
      $region35: #{merged_head_forward.1} parent=11 // pred_region
        _
      $region36: #{merged_head_forward.1} parent=11 // pred_fallthru
        _
      // Predicated region
      $region37: #{merged_head_forward.1} parent=11 // pred_check
        %p290 = pneg %p189
      $region38: #{merged_head_forward.1} parent=11 // pred_check_branch
        %292 = sbr.rel (%p290) target = $region40
      $region39: #{merged_head_forward.1} parent=11 // pred_region
        _
      $region40: #{merged_head_forward.1} parent=11 // pred_fallthru
        _
      // Predicated region
      $region41: #{merged_head_forward.1} parent=11 // pred_check
        %p293 = pneg %p210
      $region42: #{merged_head_forward.1} parent=11 // pred_check_branch
        %295 = sbr.rel (%p293) target = $region44
      $region43: #{merged_head_forward.1} parent=11 // pred_region
        _
      $region44: #{merged_head_forward.1} parent=11 // pred_fallthru
        _
      // Predicated region
      $region45: #{merged_head_forward.1} parent=11 // pred_check
        %p296 = pneg %p231
      $region46: #{merged_head_forward.1} parent=11 // pred_check_branch
        %298 = sbr.rel (%p296) target = $region48
      $region47: #{merged_head_forward.1} parent=11 // pred_region
        _
      $region48: #{merged_head_forward.1} parent=11 // pred_fallthru
        _
    $region12: #{merged_head_forward.1} parent=5 // pred_fallthru
      _
    %p299 = scmp.lt.s32.totalorder %s16, 2
    // Predicated region
    $region49: #{merged_head_forward.1} parent=5 // pred_check
      %p300 = pneg %p299
    $region50: #{merged_head_forward.1} parent=5 // pred_check_branch
      %302 = sbr.rel (%p300) target = $region52
    $region51: #{merged_head_forward.1} parent=5 // pred_region
      // Predicated region
      $region53: #{merged_head_forward.1} parent=51 // pred_check
        %p303 = pneg %p36
      $region54: #{merged_head_forward.1} parent=51 // pred_check_branch
        %305 = sbr.rel (%p303) target = $region56
      $region55: #{merged_head_forward.1} parent=51 // pred_region
        %s306 = smul.u32 3, %s16
        %p307 = scmp.lt.s32.totalorder %s306, 5
        %s308 = scalar_select %p307, %s306, 5
        %s309 = smul.addr %s308, 8
        %s310 = scalar_lea.vmem %s0, %s309
        %s311 = smul.u32 3, %s16
      $region56: #{merged_head_forward.1} parent=51 // pred_fallthru
        _
    $region52: #{merged_head_forward.1} parent=5 // pred_fallthru
      _
    %p312 = scmp.le.s32.totalorder 1, %s16
    %p313 = scmp.lt.s32.totalorder %s16, 3
    %p314 = pnand %p312, %p313
    %p315 = pneg %p314
    // Predicated region
    $region57: #{merged_head_forward.1} parent=5 // pred_check
      _
    $region58: #{merged_head_forward.1} parent=5 // pred_check_branch
      %317 = sbr.rel (%p314) target = $region60
    $region59: #{merged_head_forward.1} parent=5 // pred_region
      %s318 = ssub.s32 %s16, 1
      %s319 = smul.u32 3, %s21
      %p320 = scmp.lt.s32.totalorder %s319, 5
      %s321 = scalar_select %p320, %s319, 5
      %s322 = smul.addr %s321, 8
      %s323 = scalar_lea.vmem %s0, %s322
      %p324 = pneg %p42
      %p325 = pneg %p39
      %p326 = pneg %p63
      %p327 = pneg %p60
      %p328 = pneg %p84
      %p329 = pneg %p81
      %p330 = pneg %p105
      %p331 = pneg %p102
      %p332 = pneg %p126
      %p333 = pneg %p123
      %p334 = pneg %p147
      %p335 = pneg %p144
      %p336 = pneg %p168
      %p337 = pneg %p165
      %p338 = pneg %p189
      %p339 = pneg %p186
      %p340 = pneg %p210
      %p341 = pneg %p207
      %p342 = pneg %p231
      %p343 = pneg %p228
      %p344 = pneg %p257
      %p345 = pneg %p254
      %s346 = smul.u32 3, %s21
      %p347 = scmp.lt.s32.totalorder %s346, 5
      %s348 = scalar_select %p347, %s346, 5
      %s349 = smul.addr %s348, 8
      %s350 = scalar_lea.vmem %s10, %s349
      %s351 = smul.u32 3, %s21
      %p352 = scmp.lt.s32.totalorder %s351, 5
      %s353 = scalar_select %p352, %s351, 5
      %s354 = smul.addr %s353, 8
      %s355 = scalar_lea.vmem %s0, %s354
      %s356 = smul.u32 3, %s21
      %s357 = smul.u32 3, %s21
      %p358 = scmp.lt.s32.totalorder %s357, 5
      %s359 = scalar_select %p358, %s357, 5
      %s360 = smul.addr %s359, 8
      %s361 = scalar_lea.vmem %s10, %s360
      %s362 = smul.u32 3, %s21
      %v363 = vld [vmem:[%s355] sm:$0xff]
      %v364 = vld [vmem:[%s355 + $0x8] sm:$0xff]
      %v365 = vld [vmem:[%s355 + $0x10] sm:$0xff]
      %v366 = vld [vmem:[%s9] sm:$0x7]
      %v367 = vld [vmem:[%s2] sm:$0xff]
      %v368 = vld [vmem:[%s3] sm:$0xff]
      %369 = vrot.lane.b32.xlu0 %v363, 19
      %v370 = vpop.permute.xlu0 %369
      %371 = vrot.lane.b32.xlu0 %v364, 19
      %v372 = vpop.permute.xlu0 %371
      %373 = vrot.lane.b32.xlu0 %v365, 19
      %v374 = vpop.permute.xlu0 %373
      %v375 = vlaneseq
      %v376 = vand.u32 %v375, 127
      %vm377 = vcmp.lt.s32.totalorder %v376, 19
      %v378 = vsel %vm377, %v372, %v374
      %v379 = vsel %vm377, %v370, %v372
      %v380 = vsel %vm377, %v374, %v370
      %381 = vrot.lane.b32.xlu0 %v363, 18
      %v382 = vpop.permute.xlu0 %381
      %383 = vrot.lane.b32.xlu0 %v364, 18
      %v384 = vpop.permute.xlu0 %383
      %385 = vrot.lane.b32.xlu0 %v365, 18
      %v386 = vpop.permute.xlu0 %385
      %vm387 = vcmp.lt.s32.totalorder %v376, 18
      %v388 = vsel %vm387, %v384, %v386
      %v389 = vsel %vm387, %v382, %v384
      %v390 = vsel %vm387, %v386, %v382
      %391 = vrot.lane.b32.xlu0 %v363, 17
      %v392 = vpop.permute.xlu0 %391
      %393 = vrot.lane.b32.xlu0 %v364, 17
      %v394 = vpop.permute.xlu0 %393
      %395 = vrot.lane.b32.xlu0 %v365, 17
      %v396 = vpop.permute.xlu0 %395
      %vm397 = vcmp.lt.s32.totalorder %v376, 17
      %v398 = vsel %vm397, %v394, %v396
      %v399 = vsel %vm397, %v392, %v394
      %v400 = vsel %vm397, %v396, %v392
      %v401 = vld [vmem:[%s1] sm:$0xff]
      %402 = vrot.lane.b32.xlu0 %v363, 1
      %v403 = vpop.permute.xlu0 %402
      %404 = vrot.lane.b32.xlu0 %v364, 1
      %v405 = vpop.permute.xlu0 %404
      %406 = vrot.lane.b32.xlu0 %v365, 1
      %v407 = vpop.permute.xlu0 %406
      %vm408 = vcmp.lt.s32.totalorder %v376, 1
      %v409 = vsel %vm408, %v405, %v407
      %v410 = vsel %vm408, %v403, %v405
      %v411 = vsel %vm408, %v407, %v403
      %412 = vrot.lane.b32.xlu0 %v363, 127
      %v413 = vpop.permute.xlu0 %412
      %414 = vrot.lane.b32.xlu0 %v364, 127
      %v415 = vpop.permute.xlu0 %414
      %416 = vrot.lane.b32.xlu0 %v365, 127
      %v417 = vpop.permute.xlu0 %416
      %vm418 = vcmp.lt.s32.totalorder %v376, 127
      %v419 = vsel %vm418, %v415, %v417
      %v420 = vsel %vm418, %v413, %v415
      %v421 = vsel %vm418, %v417, %v413
      %s422 = scalar_lea.vmem %s1, 8
      %v423 = vld [vmem:[%s422] sm:$0xff]
      %vm424 = vcmask 195584
      %v426 = vsel %vm424, %v423, 0
      %428 = vmatprep.subr.mxu0 %v410
      %429 = vmatpush1.msra.mxu0 %v411
      %430 = vmatprep.subr.mxu0 %v364
      %431 = vmatpush1.msra.mxu0 %v363
      %432 = vmatprep.subr.mxu0 %v419
      %433 = vmatpush1.msra.mxu0 %v420
      %434 = vmatprep.subr.mxu0 0.0
      %435 = vmatpush1.msra.mxu0 0.0
      %436 = vmatprep.subr.mxu0 0.0
      %437 = vmatpush1.msra.mxu0 0.0
      %438 = vmatprep.subr.mxu0 0.0
      %439 = vmatpush1.msra.mxu0 0.0
      %440 = vmatprep.subr.mxu0 0.0
      %441 = vmatpush1.msra.mxu0 0.0
      %442 = vmatprep.subr.mxu0 0.0
      %443 = vmatpush1.msra.mxu0 0.0
      %444 = vmatprep.subr.mxu0 0.0
      %445 = vmatpush1.msra.mxu0 0.0
      %446 = vmatprep.subr.mxu0 0.0
      %447 = vmatpush1.msra.mxu0 0.0
      %448 = vmatprep.subr.mxu0 0.0
      %449 = vmatpush1.msra.mxu0 0.0
      %450 = vmatprep.subr.mxu0 0.0
      %451 = vmatpush1.msra.mxu0 0.0
      %452 = vmatprep.subr.mxu0 0.0
      %453 = vmatpush1.msra.mxu0 0.0
      %454 = vmatprep.subr.mxu0 0.0
      %455 = vmatpush1.msra.mxu0 0.0
      %456 = vmatprep.subr.mxu0 0.0
      %457 = vmatpush1.msra.mxu0 0.0
      %458 = vmatprep.subr.mxu0 0.0
      %459 = vmatpush1.msra.mxu0 0.0
      %460 = vmatprep.subr.mxu0 0.0
      %461 = vmatpush1.msra.mxu0 0.0
      %462 = vmatprep.subr.mxu0 0.0
      %463 = vmatpush1.msra.mxu0 0.0
      %464 = vmatprep.subr.mxu0 0.0
      %465 = vmatpush1.msra.mxu0 0.0
      %466 = vmatprep.subr.mxu0 0.0
      %467 = vmatpush1.msra.mxu0 0.0
      %468 = vmatprep.subr.mxu0 0.0
      %469 = vmatpush1.msra.mxu0 0.0
      %470 = vmatprep.subr.mxu0 0.0
      %471 = vmatpush1.msra.mxu0 0.0
      %472 = vmatprep.subr.mxu0 0.0
      %473 = vmatpush1.msra.mxu0 0.0
      %474 = vmatprep.subr.mxu0 0.0
      %475 = vmatpush1.msra.mxu0 0.0
      %476 = vmatprep.subr.mxu0 0.0
      %477 = vmatpush1.msra.mxu0 0.0
      %478 = vmatprep.subr.mxu0 0.0
      %479 = vmatpush1.msra.mxu0 0.0
      %480 = vmatprep.subr.mxu0 0.0
      %481 = vmatpush1.msra.mxu0 0.0
      %482 = vmatprep.subr.mxu0 0.0
      %483 = vmatpush1.msra.mxu0 0.0
      %484 = vmatprep.subr.mxu0 0.0
      %485 = vmatpush1.msra.mxu0 0.0
      %486 = vmatprep.subr.mxu0 0.0
      %487 = vmatpush1.msra.mxu0 0.0
      %488 = vmatprep.subr.mxu0 0.0
      %489 = vmatpush1.msra.mxu0 0.0
      %490 = vmatprep.subr.mxu0 0.0
      %491 = vmatpush1.msra.mxu0 0.0
      %492 = vmatprep.mubr.f32.mxu0 0.0
      %493 = vmatmul.mubr.f32.gmra.mrb[0].mxu0 %v426
      %v494 = vpop.f32.mrb[0].mxu0
      %v495 = vadd.f32 0.0, %v494
      %v496 = vpop.f32.mrb[0].mxu0
      %v497 = vadd.f32 0.0, %v496
      %498 = vdwg.mxu0
      %499 = vmatprep.subr.mxu0 0.0
      %500 = vmatpush1.msra.mxu0 %v409
      %501 = vmatprep.subr.mxu0 0.0
      %502 = vmatpush1.msra.mxu0 %v365
      %503 = vmatprep.subr.mxu0 0.0
      %504 = vmatpush1.msra.mxu0 %v421
      %505 = vmatprep.subr.mxu0 0.0
      %506 = vmatpush1.msra.mxu0 0.0
      %507 = vmatprep.subr.mxu0 0.0
      %508 = vmatpush1.msra.mxu0 0.0
      %509 = vmatprep.subr.mxu0 0.0
      %510 = vmatpush1.msra.mxu0 0.0
      %511 = vmatprep.subr.mxu0 0.0
      %512 = vmatpush1.msra.mxu0 0.0
      %513 = vmatprep.subr.mxu0 0.0
      %514 = vmatpush1.msra.mxu0 0.0
      %515 = vmatprep.subr.mxu0 0.0
      %516 = vmatpush1.msra.mxu0 0.0
      %517 = vmatprep.subr.mxu0 0.0
      %518 = vmatpush1.msra.mxu0 0.0
      %519 = vmatprep.subr.mxu0 0.0
      %520 = vmatpush1.msra.mxu0 0.0
      %521 = vmatprep.subr.mxu0 0.0
      %522 = vmatpush1.msra.mxu0 0.0
      %523 = vmatprep.subr.mxu0 0.0
      %524 = vmatpush1.msra.mxu0 0.0
      %525 = vmatprep.subr.mxu0 0.0
      %526 = vmatpush1.msra.mxu0 0.0
      %527 = vmatprep.subr.mxu0 0.0
      %528 = vmatpush1.msra.mxu0 0.0
      %529 = vmatprep.subr.mxu0 0.0
      %530 = vmatpush1.msra.mxu0 0.0
      %531 = vmatprep.subr.mxu0 0.0
      %532 = vmatpush1.msra.mxu0 0.0
      %533 = vmatprep.subr.mxu0 0.0
      %534 = vmatpush1.msra.mxu0 0.0
      %535 = vmatprep.subr.mxu0 0.0
      %536 = vmatpush1.msra.mxu0 0.0
      %537 = vmatprep.subr.mxu0 0.0
      %538 = vmatpush1.msra.mxu0 0.0
      %539 = vmatprep.subr.mxu0 0.0
      %540 = vmatpush1.msra.mxu0 0.0
      %541 = vmatprep.subr.mxu0 0.0
      %542 = vmatpush1.msra.mxu0 0.0
      %543 = vmatprep.subr.mxu0 0.0
      %544 = vmatpush1.msra.mxu0 0.0
      %545 = vmatprep.subr.mxu0 0.0
      %546 = vmatpush1.msra.mxu0 0.0
      %547 = vmatprep.subr.mxu0 0.0
      %548 = vmatpush1.msra.mxu0 0.0
      %549 = vmatprep.subr.mxu0 0.0
      %550 = vmatpush1.msra.mxu0 0.0
      %551 = vmatprep.subr.mxu0 0.0
      %552 = vmatpush1.msra.mxu0 0.0
      %553 = vmatprep.subr.mxu0 0.0
      %554 = vmatpush1.msra.mxu0 0.0
      %555 = vmatprep.subr.mxu0 0.0
      %556 = vmatpush1.msra.mxu0 0.0
      %557 = vmatprep.subr.mxu0 0.0
      %558 = vmatpush1.msra.mxu0 0.0
      %559 = vmatprep.subr.mxu0 0.0
      %560 = vmatpush1.msra.mxu0 0.0
      %561 = vmatprep.subr.mxu0 0.0
      %562 = vmatpush1.msra.mxu0 0.0
      %563 = vmatprep.mubr.f32.mxu0 0.0
      %564 = vmatmul.mubr.f32.gmra.mrb[0].mxu0 %v426
      %v565 = vpop.f32.mrb[0].mxu0
      %v566 = vadd.f32 0.0, %v565
      %v567 = vpop.f32.mrb[0].mxu0
      %568 = vdwg.mxu0
      %v570 = vsel %vm424, %v401, 0
      %572 = vmatprep.subr.mxu0 %v379
      %573 = vmatpush1.msra.mxu0 %v380
      %574 = vmatprep.subr.mxu0 %v389
      %575 = vmatpush1.msra.mxu0 %v390
      %576 = vmatprep.subr.mxu0 %v399
      %577 = vmatpush1.msra.mxu0 %v400
      %578 = vmatprep.subr.mxu0 0.0
      %579 = vmatpush1.msra.mxu0 0.0
      %580 = vmatprep.subr.mxu0 0.0
      %581 = vmatpush1.msra.mxu0 0.0
      %582 = vmatprep.subr.mxu0 0.0
      %583 = vmatpush1.msra.mxu0 0.0
      %584 = vmatprep.subr.mxu0 0.0
      %585 = vmatpush1.msra.mxu0 0.0
      %586 = vmatprep.subr.mxu0 0.0
      %587 = vmatpush1.msra.mxu0 0.0
      %588 = vmatprep.subr.mxu0 0.0
      %589 = vmatpush1.msra.mxu0 0.0
      %590 = vmatprep.subr.mxu0 0.0
      %591 = vmatpush1.msra.mxu0 0.0
      %592 = vmatprep.subr.mxu0 0.0
      %593 = vmatpush1.msra.mxu0 0.0
      %594 = vmatprep.subr.mxu0 0.0
      %595 = vmatpush1.msra.mxu0 0.0
      %596 = vmatprep.subr.mxu0 0.0
      %597 = vmatpush1.msra.mxu0 0.0
      %598 = vmatprep.subr.mxu0 0.0
      %599 = vmatpush1.msra.mxu0 0.0
      %600 = vmatprep.subr.mxu0 0.0
      %601 = vmatpush1.msra.mxu0 0.0
      %602 = vmatprep.subr.mxu0 0.0
      %603 = vmatpush1.msra.mxu0 0.0
      %604 = vmatprep.subr.mxu0 0.0
      %605 = vmatpush1.msra.mxu0 0.0
      %606 = vmatprep.subr.mxu0 0.0
      %607 = vmatpush1.msra.mxu0 0.0
      %608 = vmatprep.subr.mxu0 0.0
      %609 = vmatpush1.msra.mxu0 0.0
      %610 = vmatprep.subr.mxu0 0.0
      %611 = vmatpush1.msra.mxu0 0.0
      %612 = vmatprep.subr.mxu0 0.0
      %613 = vmatpush1.msra.mxu0 0.0
      %614 = vmatprep.subr.mxu0 0.0
      %615 = vmatpush1.msra.mxu0 0.0
      %616 = vmatprep.subr.mxu0 0.0
      %617 = vmatpush1.msra.mxu0 0.0
      %618 = vmatprep.subr.mxu0 0.0
      %619 = vmatpush1.msra.mxu0 0.0
      %620 = vmatprep.subr.mxu0 0.0
      %621 = vmatpush1.msra.mxu0 0.0
      %622 = vmatprep.subr.mxu0 0.0
      %623 = vmatpush1.msra.mxu0 0.0
      %624 = vmatprep.subr.mxu0 0.0
      %625 = vmatpush1.msra.mxu0 0.0
      %626 = vmatprep.subr.mxu0 0.0
      %627 = vmatpush1.msra.mxu0 0.0
      %628 = vmatprep.subr.mxu0 0.0
      %629 = vmatpush1.msra.mxu0 0.0
      %630 = vmatprep.subr.mxu0 0.0
      %631 = vmatpush1.msra.mxu0 0.0
      %632 = vmatprep.subr.mxu0 0.0
      %633 = vmatpush1.msra.mxu0 0.0
      %634 = vmatprep.subr.mxu0 0.0
      %635 = vmatpush1.msra.mxu0 0.0
      %636 = vmatprep.mubr.f32.mxu0 0.0
      %637 = vmatmul.mubr.f32.gmra.mrb[0].mxu0 %v570
      %v638 = vpop.f32.mrb[0].mxu0
      %v639 = vadd.f32 %v495, %v638
      %v640 = vpop.f32.mrb[0].mxu0
      %v641 = vadd.f32 %v497, %v640
      %642 = vdwg.mxu0
      %643 = vmatprep.subr.mxu0 0.0
      %644 = vmatpush1.msra.mxu0 %v378
      %645 = vmatprep.subr.mxu0 0.0
      %646 = vmatpush1.msra.mxu0 %v388
      %647 = vmatprep.subr.mxu0 0.0
      %648 = vmatpush1.msra.mxu0 %v398
      %649 = vmatprep.subr.mxu0 0.0
      %650 = vmatpush1.msra.mxu0 0.0
      %651 = vmatprep.subr.mxu0 0.0
      %652 = vmatpush1.msra.mxu0 0.0
      %653 = vmatprep.subr.mxu0 0.0
      %654 = vmatpush1.msra.mxu0 0.0
      %655 = vmatprep.subr.mxu0 0.0
      %656 = vmatpush1.msra.mxu0 0.0
      %657 = vmatprep.subr.mxu0 0.0
      %658 = vmatpush1.msra.mxu0 0.0
      %659 = vmatprep.subr.mxu0 0.0
      %660 = vmatpush1.msra.mxu0 0.0
      %661 = vmatprep.subr.mxu0 0.0
      %662 = vmatpush1.msra.mxu0 0.0
      %663 = vmatprep.subr.mxu0 0.0
      %664 = vmatpush1.msra.mxu0 0.0
      %665 = vmatprep.subr.mxu0 0.0
      %666 = vmatpush1.msra.mxu0 0.0
      %667 = vmatprep.subr.mxu0 0.0
      %668 = vmatpush1.msra.mxu0 0.0
      %669 = vmatprep.subr.mxu0 0.0
      %670 = vmatpush1.msra.mxu0 0.0
      %671 = vmatprep.subr.mxu0 0.0
      %672 = vmatpush1.msra.mxu0 0.0
      %673 = vmatprep.subr.mxu0 0.0
      %674 = vmatpush1.msra.mxu0 0.0
      %675 = vmatprep.subr.mxu0 0.0
      %676 = vmatpush1.msra.mxu0 0.0
      %677 = vmatprep.subr.mxu0 0.0
      %678 = vmatpush1.msra.mxu0 0.0
      %679 = vmatprep.subr.mxu0 0.0
      %680 = vmatpush1.msra.mxu0 0.0
      %681 = vmatprep.subr.mxu0 0.0
      %682 = vmatpush1.msra.mxu0 0.0
      %683 = vmatprep.subr.mxu0 0.0
      %684 = vmatpush1.msra.mxu0 0.0
      %685 = vmatprep.subr.mxu0 0.0
      %686 = vmatpush1.msra.mxu0 0.0
      %687 = vmatprep.subr.mxu0 0.0
      %688 = vmatpush1.msra.mxu0 0.0
      %689 = vmatprep.subr.mxu0 0.0
      %690 = vmatpush1.msra.mxu0 0.0
      %691 = vmatprep.subr.mxu0 0.0
      %692 = vmatpush1.msra.mxu0 0.0
      %693 = vmatprep.subr.mxu0 0.0
      %694 = vmatpush1.msra.mxu0 0.0
      %695 = vmatprep.subr.mxu0 0.0
      %696 = vmatpush1.msra.mxu0 0.0
      %697 = vmatprep.subr.mxu0 0.0
      %698 = vmatpush1.msra.mxu0 0.0
      %699 = vmatprep.subr.mxu0 0.0
      %700 = vmatpush1.msra.mxu0 0.0
      %701 = vmatprep.subr.mxu0 0.0
      %702 = vmatpush1.msra.mxu0 0.0
      %703 = vmatprep.subr.mxu0 0.0
      %704 = vmatpush1.msra.mxu0 0.0
      %705 = vmatprep.subr.mxu0 0.0
      %706 = vmatpush1.msra.mxu0 0.0
      %707 = vmatprep.mubr.f32.mxu0 0.0
      %708 = vmatmul.mubr.f32.gmra.mrb[0].mxu0 %v570
      %v709 = vpop.f32.mrb[0].mxu0
      %v710 = vadd.f32 %v566, %v709
      %v711 = vpop.f32.mrb[0].mxu0
      %712 = vdwg.mxu0
      %713 = vrot.lane.b32.xlu0 %v363, 111
      %v714 = vpop.permute.xlu0 %713
      %715 = vrot.lane.b32.xlu0 %v364, 111
      %v716 = vpop.permute.xlu0 %715
      %717 = vrot.lane.b32.xlu0 %v365, 111
      %v718 = vpop.permute.xlu0 %717
      %vm719 = vcmp.lt.s32.totalorder %v376, 111
      %v720 = vsel %vm719, %v716, %v718
      %v721 = vsel %vm719, %v714, %v716
      %v722 = vsel %vm719, %v718, %v714
      %723 = vrot.lane.b32.xlu0 %v363, 110
      %v724 = vpop.permute.xlu0 %723
      %725 = vrot.lane.b32.xlu0 %v364, 110
      %v726 = vpop.permute.xlu0 %725
      %727 = vrot.lane.b32.xlu0 %v365, 110
      %v728 = vpop.permute.xlu0 %727
      %vm729 = vcmp.lt.s32.totalorder %v376, 110
      %v730 = vsel %vm729, %v726, %v728
      %v731 = vsel %vm729, %v724, %v726
      %v732 = vsel %vm729, %v728, %v724
      %733 = vrot.lane.b32.xlu0 %v363, 109
      %v734 = vpop.permute.xlu0 %733
      %735 = vrot.lane.b32.xlu0 %v364, 109
      %v736 = vpop.permute.xlu0 %735
      %737 = vrot.lane.b32.xlu0 %v365, 109
      %v738 = vpop.permute.xlu0 %737
      %vm739 = vcmp.lt.s32.totalorder %v376, 109
      %v740 = vsel %vm739, %v736, %v738
      %v741 = vsel %vm739, %v734, %v736
      %v742 = vsel %vm739, %v738, %v734
      %s743 = scalar_lea.vmem %s1, 16
      %v744 = vld [vmem:[%s743] sm:$0xff]
      %v746 = vsel %vm424, %v744, 0
      %748 = vmatprep.subr.mxu0 %v720
      %749 = vmatpush1.msra.mxu0 %v721
      %750 = vmatprep.subr.mxu0 %v730
      %751 = vmatpush1.msra.mxu0 %v731
      %752 = vmatprep.subr.mxu0 %v740
      %753 = vmatpush1.msra.mxu0 %v741
      %754 = vmatprep.subr.mxu0 0.0
      %755 = vmatpush1.msra.mxu0 0.0
      %756 = vmatprep.subr.mxu0 0.0
      %757 = vmatpush1.msra.mxu0 0.0
      %758 = vmatprep.subr.mxu0 0.0
      %759 = vmatpush1.msra.mxu0 0.0
      %760 = vmatprep.subr.mxu0 0.0
      %761 = vmatpush1.msra.mxu0 0.0
      %762 = vmatprep.subr.mxu0 0.0
      %763 = vmatpush1.msra.mxu0 0.0
      %764 = vmatprep.subr.mxu0 0.0
      %765 = vmatpush1.msra.mxu0 0.0
      %766 = vmatprep.subr.mxu0 0.0
      %767 = vmatpush1.msra.mxu0 0.0
      %768 = vmatprep.subr.mxu0 0.0
      %769 = vmatpush1.msra.mxu0 0.0
      %770 = vmatprep.subr.mxu0 0.0
      %771 = vmatpush1.msra.mxu0 0.0
      %772 = vmatprep.subr.mxu0 0.0
      %773 = vmatpush1.msra.mxu0 0.0
      %774 = vmatprep.subr.mxu0 0.0
      %775 = vmatpush1.msra.mxu0 0.0
      %776 = vmatprep.subr.mxu0 0.0
      %777 = vmatpush1.msra.mxu0 0.0
      %778 = vmatprep.subr.mxu0 0.0
      %779 = vmatpush1.msra.mxu0 0.0
      %780 = vmatprep.subr.mxu0 0.0
      %781 = vmatpush1.msra.mxu0 0.0
      %782 = vmatprep.subr.mxu0 0.0
      %783 = vmatpush1.msra.mxu0 0.0
      %784 = vmatprep.subr.mxu0 0.0
      %785 = vmatpush1.msra.mxu0 0.0
      %786 = vmatprep.subr.mxu0 0.0
      %787 = vmatpush1.msra.mxu0 0.0
      %788 = vmatprep.subr.mxu0 0.0
      %789 = vmatpush1.msra.mxu0 0.0
      %790 = vmatprep.subr.mxu0 0.0
      %791 = vmatpush1.msra.mxu0 0.0
      %792 = vmatprep.subr.mxu0 0.0
      %793 = vmatpush1.msra.mxu0 0.0
      %794 = vmatprep.subr.mxu0 0.0
      %795 = vmatpush1.msra.mxu0 0.0
      %796 = vmatprep.subr.mxu0 0.0
      %797 = vmatpush1.msra.mxu0 0.0
      %798 = vmatprep.subr.mxu0 0.0
      %799 = vmatpush1.msra.mxu0 0.0
      %800 = vmatprep.subr.mxu0 0.0
      %801 = vmatpush1.msra.mxu0 0.0
      %802 = vmatprep.subr.mxu0 0.0
      %803 = vmatpush1.msra.mxu0 0.0
      %804 = vmatprep.subr.mxu0 0.0
      %805 = vmatpush1.msra.mxu0 0.0
      %806 = vmatprep.subr.mxu0 0.0
      %807 = vmatpush1.msra.mxu0 0.0
      %808 = vmatprep.subr.mxu0 0.0
      %809 = vmatpush1.msra.mxu0 0.0
      %810 = vmatprep.subr.mxu0 0.0
      %811 = vmatpush1.msra.mxu0 0.0
      %812 = vmatprep.mubr.f32.mxu0 0.0
      %813 = vmatmul.mubr.f32.gmra.mrb[0].mxu0 %v746
      %v814 = vpop.f32.mrb[0].mxu0
      %v815 = vadd.f32 0.0, %v814
      %v816 = vpop.f32.mrb[0].mxu0
      %v817 = vadd.f32 0.0, %v816
      %818 = vdwg.mxu0
      %819 = vmatprep.subr.mxu0 0.0
      %820 = vmatpush1.msra.mxu0 %v722
      %821 = vmatprep.subr.mxu0 0.0
      %822 = vmatpush1.msra.mxu0 %v732
      %823 = vmatprep.subr.mxu0 0.0
      %824 = vmatpush1.msra.mxu0 %v742
      %825 = vmatprep.subr.mxu0 0.0
      %826 = vmatpush1.msra.mxu0 0.0
      %827 = vmatprep.subr.mxu0 0.0
      %828 = vmatpush1.msra.mxu0 0.0
      %829 = vmatprep.subr.mxu0 0.0
      %830 = vmatpush1.msra.mxu0 0.0
      %831 = vmatprep.subr.mxu0 0.0
      %832 = vmatpush1.msra.mxu0 0.0
      %833 = vmatprep.subr.mxu0 0.0
      %834 = vmatpush1.msra.mxu0 0.0
      %835 = vmatprep.subr.mxu0 0.0
      %836 = vmatpush1.msra.mxu0 0.0
      %837 = vmatprep.subr.mxu0 0.0
      %838 = vmatpush1.msra.mxu0 0.0
      %839 = vmatprep.subr.mxu0 0.0
      %840 = vmatpush1.msra.mxu0 0.0
      %841 = vmatprep.subr.mxu0 0.0
      %842 = vmatpush1.msra.mxu0 0.0
      %843 = vmatprep.subr.mxu0 0.0
      %844 = vmatpush1.msra.mxu0 0.0
      %845 = vmatprep.subr.mxu0 0.0
      %846 = vmatpush1.msra.mxu0 0.0
      %847 = vmatprep.subr.mxu0 0.0
      %848 = vmatpush1.msra.mxu0 0.0
      %849 = vmatprep.subr.mxu0 0.0
      %850 = vmatpush1.msra.mxu0 0.0
      %851 = vmatprep.subr.mxu0 0.0
      %852 = vmatpush1.msra.mxu0 0.0
      %853 = vmatprep.subr.mxu0 0.0
      %854 = vmatpush1.msra.mxu0 0.0
      %855 = vmatprep.subr.mxu0 0.0
      %856 = vmatpush1.msra.mxu0 0.0
      %857 = vmatprep.subr.mxu0 0.0
      %858 = vmatpush1.msra.mxu0 0.0
      %859 = vmatprep.subr.mxu0 0.0
      %860 = vmatpush1.msra.mxu0 0.0
      %861 = vmatprep.subr.mxu0 0.0
      %862 = vmatpush1.msra.mxu0 0.0
      %863 = vmatprep.subr.mxu0 0.0
      %864 = vmatpush1.msra.mxu0 0.0
      %865 = vmatprep.subr.mxu0 0.0
      %866 = vmatpush1.msra.mxu0 0.0
      %867 = vmatprep.subr.mxu0 0.0
      %868 = vmatpush1.msra.mxu0 0.0
      %869 = vmatprep.subr.mxu0 0.0
      %870 = vmatpush1.msra.mxu0 0.0
      %871 = vmatprep.subr.mxu0 0.0
      %872 = vmatpush1.msra.mxu0 0.0
      %873 = vmatprep.subr.mxu0 0.0
      %874 = vmatpush1.msra.mxu0 0.0
      %875 = vmatprep.subr.mxu0 0.0
      %876 = vmatpush1.msra.mxu0 0.0
      %877 = vmatprep.subr.mxu0 0.0
      %878 = vmatpush1.msra.mxu0 0.0
      %879 = vmatprep.subr.mxu0 0.0
      %880 = vmatpush1.msra.mxu0 0.0
      %881 = vmatprep.subr.mxu0 0.0
      %882 = vmatpush1.msra.mxu0 0.0
      %883 = vmatprep.mubr.f32.mxu0 0.0
      %884 = vmatmul.mubr.f32.gmra.mrb[0].mxu0 %v746
      %v885 = vpop.f32.mrb[0].mxu0
      %v886 = vadd.f32 0.0, %v885
      %v887 = vpop.f32.mrb[0].mxu0
      %888 = vdwg.mxu0
      %v889 = vadd.f32 %v639, %v815
      %v890 = vadd.f32 %v641, %v817
      %v891 = vadd.f32 %v710, %v886
      %893 = vset.pattern.permute.xlu0 0
      %894 = vperm.xlu0 %893, %v367
      %v895 = vpop.permute.xlu0 %894
      %v897 = vmul.f32 %v889, %v895
      %v898 = vmul.f32 %v890, %v895
      %v899 = vmul.f32 %v891, %v895
      %901 = vset.pattern.permute.xlu0 0
      %902 = vperm.xlu0 %901, %v368
      %v903 = vpop.permute.xlu0 %902
      %v905 = vadd.f32 %v897, %v903
      %v906 = vadd.f32 %v898, %v903
      %v907 = vadd.f32 %v899, %v903
      %v908 = vmax.f32 %v905, 0.0
      %v909 = vmax.f32 %v906, 0.0
      %v910 = vmax.f32 %v907, 0.0
      %v912 = vlaneseq
      %v913 = vshrl.u32 %v912, 7
      %v914 = vsub.s32 0, %v913
      %v915 = vrot.slane %v366, %v914
      %v916 = vlaneseq
      %v917 = vshrl.u32 %v916, 7
      %v918 = vsub.s32 1, %v917
      %v919 = vrot.slane %v366, %v918
      %v920 = vlaneseq
      %v921 = vshrl.u32 %v920, 7
      %v922 = vsub.s32 2, %v921
      %v923 = vrot.slane %v366, %v922
      %v927 = vmul.f32 %v908, %v915
      %v928 = vmul.f32 %v909, %v919
      %v929 = vmul.f32 %v910, %v923
      %v930 = vld [vmem:[%s5] sm:$0xff]
      %v931 = vld [vmem:[%s6] sm:$0xff]
      %932 = vrot.lane.b32.xlu0 %v927, 19
      %v933 = vpop.permute.xlu0 %932
      %934 = vrot.lane.b32.xlu0 %v928, 19
      %v935 = vpop.permute.xlu0 %934
      %936 = vrot.lane.b32.xlu0 %v929, 19
      %v937 = vpop.permute.xlu0 %936
      %v938 = vsel %vm377, %v935, %v937
      %v939 = vsel %vm377, %v933, %v935
      %v940 = vsel %vm377, %v937, %v933
      %941 = vrot.lane.b32.xlu0 %v927, 18
      %v942 = vpop.permute.xlu0 %941
      %943 = vrot.lane.b32.xlu0 %v928, 18
      %v944 = vpop.permute.xlu0 %943
      %945 = vrot.lane.b32.xlu0 %v929, 18
      %v946 = vpop.permute.xlu0 %945
      %v947 = vsel %vm387, %v944, %v946
      %v948 = vsel %vm387, %v942, %v944
      %v949 = vsel %vm387, %v946, %v942
      %950 = vrot.lane.b32.xlu0 %v927, 17
      %v951 = vpop.permute.xlu0 %950
      %952 = vrot.lane.b32.xlu0 %v928, 17
      %v953 = vpop.permute.xlu0 %952
      %954 = vrot.lane.b32.xlu0 %v929, 17
      %v955 = vpop.permute.xlu0 %954
      %v956 = vsel %vm397, %v953, %v955
      %v957 = vsel %vm397, %v951, %v953
      %v958 = vsel %vm397, %v955, %v951
      %v959 = vld [vmem:[%s4] sm:$0xff]
      %960 = vrot.lane.b32.xlu0 %v927, 1
      %v961 = vpop.permute.xlu0 %960
      %962 = vrot.lane.b32.xlu0 %v928, 1
      %v963 = vpop.permute.xlu0 %962
      %964 = vrot.lane.b32.xlu0 %v929, 1
      %v965 = vpop.permute.xlu0 %964
      %v966 = vsel %vm408, %v963, %v965
      %v967 = vsel %vm408, %v961, %v963
      %v968 = vsel %vm408, %v965, %v961
      %969 = vrot.lane.b32.xlu0 %v927, 127
      %v970 = vpop.permute.xlu0 %969
      %971 = vrot.lane.b32.xlu0 %v928, 127
      %v972 = vpop.permute.xlu0 %971
      %973 = vrot.lane.b32.xlu0 %v929, 127
      %v974 = vpop.permute.xlu0 %973
      %v975 = vsel %vm418, %v972, %v974
      %v976 = vsel %vm418, %v970, %v972
      %v977 = vsel %vm418, %v974, %v970
      %s978 = scalar_lea.vmem %s4, 8
      %v979 = vld [vmem:[%s978] sm:$0xff]
      %v981 = vsel %vm424, %v979, 0
      %983 = vmatprep.subr.mxu0 %v967
      %984 = vmatpush1.msra.mxu0 %v968
      %985 = vmatprep.subr.mxu0 %v928
      %986 = vmatpush1.msra.mxu0 %v927
      %987 = vmatprep.subr.mxu0 %v975
      %988 = vmatpush1.msra.mxu0 %v976
      %989 = vmatprep.subr.mxu0 0.0
      %990 = vmatpush1.msra.mxu0 0.0
      %991 = vmatprep.subr.mxu0 0.0
      %992 = vmatpush1.msra.mxu0 0.0
      %993 = vmatprep.subr.mxu0 0.0
      %994 = vmatpush1.msra.mxu0 0.0
      %995 = vmatprep.subr.mxu0 0.0
      %996 = vmatpush1.msra.mxu0 0.0
      %997 = vmatprep.subr.mxu0 0.0
      %998 = vmatpush1.msra.mxu0 0.0
      %999 = vmatprep.subr.mxu0 0.0
      %1000 = vmatpush1.msra.mxu0 0.0
      %1001 = vmatprep.subr.mxu0 0.0
      %1002 = vmatpush1.msra.mxu0 0.0
      %1003 = vmatprep.subr.mxu0 0.0
      %1004 = vmatpush1.msra.mxu0 0.0
      %1005 = vmatprep.subr.mxu0 0.0
      %1006 = vmatpush1.msra.mxu0 0.0
      %1007 = vmatprep.subr.mxu0 0.0
      %1008 = vmatpush1.msra.mxu0 0.0
      %1009 = vmatprep.subr.mxu0 0.0
      %1010 = vmatpush1.msra.mxu0 0.0
      %1011 = vmatprep.subr.mxu0 0.0
      %1012 = vmatpush1.msra.mxu0 0.0
      %1013 = vmatprep.subr.mxu0 0.0
      %1014 = vmatpush1.msra.mxu0 0.0
      %1015 = vmatprep.subr.mxu0 0.0
      %1016 = vmatpush1.msra.mxu0 0.0
      %1017 = vmatprep.subr.mxu0 0.0
      %1018 = vmatpush1.msra.mxu0 0.0
      %1019 = vmatprep.subr.mxu0 0.0
      %1020 = vmatpush1.msra.mxu0 0.0
      %1021 = vmatprep.subr.mxu0 0.0
      %1022 = vmatpush1.msra.mxu0 0.0
      %1023 = vmatprep.subr.mxu0 0.0
      %1024 = vmatpush1.msra.mxu0 0.0
      %1025 = vmatprep.subr.mxu0 0.0
      %1026 = vmatpush1.msra.mxu0 0.0
      %1027 = vmatprep.subr.mxu0 0.0
      %1028 = vmatpush1.msra.mxu0 0.0
      %1029 = vmatprep.subr.mxu0 0.0
      %1030 = vmatpush1.msra.mxu0 0.0
      %1031 = vmatprep.subr.mxu0 0.0
      %1032 = vmatpush1.msra.mxu0 0.0
      %1033 = vmatprep.subr.mxu0 0.0
      %1034 = vmatpush1.msra.mxu0 0.0
      %1035 = vmatprep.subr.mxu0 0.0
      %1036 = vmatpush1.msra.mxu0 0.0
      %1037 = vmatprep.subr.mxu0 0.0
      %1038 = vmatpush1.msra.mxu0 0.0
      %1039 = vmatprep.subr.mxu0 0.0
      %1040 = vmatpush1.msra.mxu0 0.0
      %1041 = vmatprep.subr.mxu0 0.0
      %1042 = vmatpush1.msra.mxu0 0.0
      %1043 = vmatprep.subr.mxu0 0.0
      %1044 = vmatpush1.msra.mxu0 0.0
      %1045 = vmatprep.subr.mxu0 0.0
      %1046 = vmatpush1.msra.mxu0 0.0
      %1047 = vmatprep.mubr.f32.mxu0 0.0
      %1048 = vmatmul.mubr.f32.gmra.mrb[0].mxu0 %v981
      %v1049 = vpop.f32.mrb[0].mxu0
      %v1050 = vadd.f32 0.0, %v1049
      %v1051 = vpop.f32.mrb[0].mxu0
      %v1052 = vadd.f32 0.0, %v1051
      %1053 = vdwg.mxu0
      %1054 = vmatprep.subr.mxu0 0.0
      %1055 = vmatpush1.msra.mxu0 %v966
      %1056 = vmatprep.subr.mxu0 0.0
      %1057 = vmatpush1.msra.mxu0 %v929
      %1058 = vmatprep.subr.mxu0 0.0
      %1059 = vmatpush1.msra.mxu0 %v977
      %1060 = vmatprep.subr.mxu0 0.0
      %1061 = vmatpush1.msra.mxu0 0.0
      %1062 = vmatprep.subr.mxu0 0.0
      %1063 = vmatpush1.msra.mxu0 0.0
      %1064 = vmatprep.subr.mxu0 0.0
      %1065 = vmatpush1.msra.mxu0 0.0
      %1066 = vmatprep.subr.mxu0 0.0
      %1067 = vmatpush1.msra.mxu0 0.0
      %1068 = vmatprep.subr.mxu0 0.0
      %1069 = vmatpush1.msra.mxu0 0.0
      %1070 = vmatprep.subr.mxu0 0.0
      %1071 = vmatpush1.msra.mxu0 0.0
      %1072 = vmatprep.subr.mxu0 0.0
      %1073 = vmatpush1.msra.mxu0 0.0
      %1074 = vmatprep.subr.mxu0 0.0
      %1075 = vmatpush1.msra.mxu0 0.0
      %1076 = vmatprep.subr.mxu0 0.0
      %1077 = vmatpush1.msra.mxu0 0.0
      %1078 = vmatprep.subr.mxu0 0.0
      %1079 = vmatpush1.msra.mxu0 0.0
      %1080 = vmatprep.subr.mxu0 0.0
      %1081 = vmatpush1.msra.mxu0 0.0
      %1082 = vmatprep.subr.mxu0 0.0
      %1083 = vmatpush1.msra.mxu0 0.0
      %1084 = vmatprep.subr.mxu0 0.0
      %1085 = vmatpush1.msra.mxu0 0.0
      %1086 = vmatprep.subr.mxu0 0.0
      %1087 = vmatpush1.msra.mxu0 0.0
      %1088 = vmatprep.subr.mxu0 0.0
      %1089 = vmatpush1.msra.mxu0 0.0
      %1090 = vmatprep.subr.mxu0 0.0
      %1091 = vmatpush1.msra.mxu0 0.0
      %1092 = vmatprep.subr.mxu0 0.0
      %1093 = vmatpush1.msra.mxu0 0.0
      %1094 = vmatprep.subr.mxu0 0.0
      %1095 = vmatpush1.msra.mxu0 0.0
      %1096 = vmatprep.subr.mxu0 0.0
      %1097 = vmatpush1.msra.mxu0 0.0
      %1098 = vmatprep.subr.mxu0 0.0
      %1099 = vmatpush1.msra.mxu0 0.0
      %1100 = vmatprep.subr.mxu0 0.0
      %1101 = vmatpush1.msra.mxu0 0.0
      %1102 = vmatprep.subr.mxu0 0.0
      %1103 = vmatpush1.msra.mxu0 0.0
      %1104 = vmatprep.subr.mxu0 0.0
      %1105 = vmatpush1.msra.mxu0 0.0
      %1106 = vmatprep.subr.mxu0 0.0
      %1107 = vmatpush1.msra.mxu0 0.0
      %1108 = vmatprep.subr.mxu0 0.0
      %1109 = vmatpush1.msra.mxu0 0.0
      %1110 = vmatprep.subr.mxu0 0.0
      %1111 = vmatpush1.msra.mxu0 0.0
      %1112 = vmatprep.subr.mxu0 0.0
      %1113 = vmatpush1.msra.mxu0 0.0
      %1114 = vmatprep.subr.mxu0 0.0
      %1115 = vmatpush1.msra.mxu0 0.0
      %1116 = vmatprep.subr.mxu0 0.0
      %1117 = vmatpush1.msra.mxu0 0.0
      %1118 = vmatprep.mubr.f32.mxu0 0.0
      %1119 = vmatmul.mubr.f32.gmra.mrb[0].mxu0 %v981
      %v1120 = vpop.f32.mrb[0].mxu0
      %v1121 = vadd.f32 0.0, %v1120
      %v1122 = vpop.f32.mrb[0].mxu0
      %1123 = vdwg.mxu0
      %v1125 = vsel %vm424, %v959, 0
      %1127 = vmatprep.subr.mxu0 %v939
      %1128 = vmatpush1.msra.mxu0 %v940
      %1129 = vmatprep.subr.mxu0 %v948
      %1130 = vmatpush1.msra.mxu0 %v949
      %1131 = vmatprep.subr.mxu0 %v957
      %1132 = vmatpush1.msra.mxu0 %v958
      %1133 = vmatprep.subr.mxu0 0.0
      %1134 = vmatpush1.msra.mxu0 0.0
      %1135 = vmatprep.subr.mxu0 0.0
      %1136 = vmatpush1.msra.mxu0 0.0
      %1137 = vmatprep.subr.mxu0 0.0
      %1138 = vmatpush1.msra.mxu0 0.0
      %1139 = vmatprep.subr.mxu0 0.0
      %1140 = vmatpush1.msra.mxu0 0.0
      %1141 = vmatprep.subr.mxu0 0.0
      %1142 = vmatpush1.msra.mxu0 0.0
      %1143 = vmatprep.subr.mxu0 0.0
      %1144 = vmatpush1.msra.mxu0 0.0
      %1145 = vmatprep.subr.mxu0 0.0
      %1146 = vmatpush1.msra.mxu0 0.0
      %1147 = vmatprep.subr.mxu0 0.0
      %1148 = vmatpush1.msra.mxu0 0.0
      %1149 = vmatprep.subr.mxu0 0.0
      %1150 = vmatpush1.msra.mxu0 0.0
      %1151 = vmatprep.subr.mxu0 0.0
      %1152 = vmatpush1.msra.mxu0 0.0
      %1153 = vmatprep.subr.mxu0 0.0
      %1154 = vmatpush1.msra.mxu0 0.0
      %1155 = vmatprep.subr.mxu0 0.0
      %1156 = vmatpush1.msra.mxu0 0.0
      %1157 = vmatprep.subr.mxu0 0.0
      %1158 = vmatpush1.msra.mxu0 0.0
      %1159 = vmatprep.subr.mxu0 0.0
      %1160 = vmatpush1.msra.mxu0 0.0
      %1161 = vmatprep.subr.mxu0 0.0
      %1162 = vmatpush1.msra.mxu0 0.0
      %1163 = vmatprep.subr.mxu0 0.0
      %1164 = vmatpush1.msra.mxu0 0.0
      %1165 = vmatprep.subr.mxu0 0.0
      %1166 = vmatpush1.msra.mxu0 0.0
      %1167 = vmatprep.subr.mxu0 0.0
      %1168 = vmatpush1.msra.mxu0 0.0
      %1169 = vmatprep.subr.mxu0 0.0
      %1170 = vmatpush1.msra.mxu0 0.0
      %1171 = vmatprep.subr.mxu0 0.0
      %1172 = vmatpush1.msra.mxu0 0.0
      %1173 = vmatprep.subr.mxu0 0.0
      %1174 = vmatpush1.msra.mxu0 0.0
      %1175 = vmatprep.subr.mxu0 0.0
      %1176 = vmatpush1.msra.mxu0 0.0
      %1177 = vmatprep.subr.mxu0 0.0
      %1178 = vmatpush1.msra.mxu0 0.0
      %1179 = vmatprep.subr.mxu0 0.0
      %1180 = vmatpush1.msra.mxu0 0.0
      %1181 = vmatprep.subr.mxu0 0.0
      %1182 = vmatpush1.msra.mxu0 0.0
      %1183 = vmatprep.subr.mxu0 0.0
      %1184 = vmatpush1.msra.mxu0 0.0
      %1185 = vmatprep.subr.mxu0 0.0
      %1186 = vmatpush1.msra.mxu0 0.0
      %1187 = vmatprep.subr.mxu0 0.0
      %1188 = vmatpush1.msra.mxu0 0.0
      %1189 = vmatprep.subr.mxu0 0.0
      %1190 = vmatpush1.msra.mxu0 0.0
      %1191 = vmatprep.mubr.f32.mxu0 0.0
      %1192 = vmatmul.mubr.f32.gmra.mrb[0].mxu0 %v1125
      %v1193 = vpop.f32.mrb[0].mxu0
      %v1194 = vadd.f32 %v1050, %v1193
      %v1195 = vpop.f32.mrb[0].mxu0
      %v1196 = vadd.f32 %v1052, %v1195
      %1197 = vdwg.mxu0
      %1198 = vmatprep.subr.mxu0 0.0
      %1199 = vmatpush1.msra.mxu0 %v938
      %1200 = vmatprep.subr.mxu0 0.0
      %1201 = vmatpush1.msra.mxu0 %v947
      %1202 = vmatprep.subr.mxu0 0.0
      %1203 = vmatpush1.msra.mxu0 %v956
      %1204 = vmatprep.subr.mxu0 0.0
      %1205 = vmatpush1.msra.mxu0 0.0
      %1206 = vmatprep.subr.mxu0 0.0
      %1207 = vmatpush1.msra.mxu0 0.0
      %1208 = vmatprep.subr.mxu0 0.0
      %1209 = vmatpush1.msra.mxu0 0.0
      %1210 = vmatprep.subr.mxu0 0.0
      %1211 = vmatpush1.msra.mxu0 0.0
      %1212 = vmatprep.subr.mxu0 0.0
      %1213 = vmatpush1.msra.mxu0 0.0
      %1214 = vmatprep.subr.mxu0 0.0
      %1215 = vmatpush1.msra.mxu0 0.0
      %1216 = vmatprep.subr.mxu0 0.0
      %1217 = vmatpush1.msra.mxu0 0.0
      %1218 = vmatprep.subr.mxu0 0.0
      %1219 = vmatpush1.msra.mxu0 0.0
      %1220 = vmatprep.subr.mxu0 0.0
      %1221 = vmatpush1.msra.mxu0 0.0
      %1222 = vmatprep.subr.mxu0 0.0
      %1223 = vmatpush1.msra.mxu0 0.0
      %1224 = vmatprep.subr.mxu0 0.0
      %1225 = vmatpush1.msra.mxu0 0.0
      %1226 = vmatprep.subr.mxu0 0.0
      %1227 = vmatpush1.msra.mxu0 0.0
      %1228 = vmatprep.subr.mxu0 0.0
      %1229 = vmatpush1.msra.mxu0 0.0
      %1230 = vmatprep.subr.mxu0 0.0
      %1231 = vmatpush1.msra.mxu0 0.0
      %1232 = vmatprep.subr.mxu0 0.0
      %1233 = vmatpush1.msra.mxu0 0.0
      %1234 = vmatprep.subr.mxu0 0.0
      %1235 = vmatpush1.msra.mxu0 0.0
      %1236 = vmatprep.subr.mxu0 0.0
      %1237 = vmatpush1.msra.mxu0 0.0
      %1238 = vmatprep.subr.mxu0 0.0
      %1239 = vmatpush1.msra.mxu0 0.0
      %1240 = vmatprep.subr.mxu0 0.0
      %1241 = vmatpush1.msra.mxu0 0.0
      %1242 = vmatprep.subr.mxu0 0.0
      %1243 = vmatpush1.msra.mxu0 0.0
      %1244 = vmatprep.subr.mxu0 0.0
      %1245 = vmatpush1.msra.mxu0 0.0
      %1246 = vmatprep.subr.mxu0 0.0
      %1247 = vmatpush1.msra.mxu0 0.0
      %1248 = vmatprep.subr.mxu0 0.0
      %1249 = vmatpush1.msra.mxu0 0.0
      %1250 = vmatprep.subr.mxu0 0.0
      %1251 = vmatpush1.msra.mxu0 0.0
      %1252 = vmatprep.subr.mxu0 0.0
      %1253 = vmatpush1.msra.mxu0 0.0
      %1254 = vmatprep.subr.mxu0 0.0
      %1255 = vmatpush1.msra.mxu0 0.0
      %1256 = vmatprep.subr.mxu0 0.0
      %1257 = vmatpush1.msra.mxu0 0.0
      %1258 = vmatprep.subr.mxu0 0.0
      %1259 = vmatpush1.msra.mxu0 0.0
      %1260 = vmatprep.subr.mxu0 0.0
      %1261 = vmatpush1.msra.mxu0 0.0
      %1262 = vmatprep.mubr.f32.mxu0 0.0
      %1263 = vmatmul.mubr.f32.gmra.mrb[0].mxu0 %v1125
      %v1264 = vpop.f32.mrb[0].mxu0
      %v1265 = vadd.f32 %v1121, %v1264
      %v1266 = vpop.f32.mrb[0].mxu0
      %1267 = vdwg.mxu0
      %1268 = vrot.lane.b32.xlu0 %v927, 111
      %v1269 = vpop.permute.xlu0 %1268
      %1270 = vrot.lane.b32.xlu0 %v928, 111
      %v1271 = vpop.permute.xlu0 %1270
      %1272 = vrot.lane.b32.xlu0 %v929, 111
      %v1273 = vpop.permute.xlu0 %1272
      %v1274 = vsel %vm719, %v1271, %v1273
      %v1275 = vsel %vm719, %v1269, %v1271
      %v1276 = vsel %vm719, %v1273, %v1269
      %1277 = vrot.lane.b32.xlu0 %v927, 110
      %v1278 = vpop.permute.xlu0 %1277
      %1279 = vrot.lane.b32.xlu0 %v928, 110
      %v1280 = vpop.permute.xlu0 %1279
      %1281 = vrot.lane.b32.xlu0 %v929, 110
      %v1282 = vpop.permute.xlu0 %1281
      %v1283 = vsel %vm729, %v1280, %v1282
      %v1284 = vsel %vm729, %v1278, %v1280
      %v1285 = vsel %vm729, %v1282, %v1278
      %1286 = vrot.lane.b32.xlu0 %v927, 109
      %v1287 = vpop.permute.xlu0 %1286
      %1288 = vrot.lane.b32.xlu0 %v928, 109
      %v1289 = vpop.permute.xlu0 %1288
      %1290 = vrot.lane.b32.xlu0 %v929, 109
      %v1291 = vpop.permute.xlu0 %1290
      %v1292 = vsel %vm739, %v1289, %v1291
      %v1293 = vsel %vm739, %v1287, %v1289
      %v1294 = vsel %vm739, %v1291, %v1287
      %s1295 = scalar_lea.vmem %s4, 16
      %v1296 = vld [vmem:[%s1295] sm:$0xff]
      %v1298 = vsel %vm424, %v1296, 0
      %1300 = vmatprep.subr.mxu0 %v1274
      %1301 = vmatpush1.msra.mxu0 %v1275
      %1302 = vmatprep.subr.mxu0 %v1283
      %1303 = vmatpush1.msra.mxu0 %v1284
      %1304 = vmatprep.subr.mxu0 %v1292
      %1305 = vmatpush1.msra.mxu0 %v1293
      %1306 = vmatprep.subr.mxu0 0.0
      %1307 = vmatpush1.msra.mxu0 0.0
      %1308 = vmatprep.subr.mxu0 0.0
      %1309 = vmatpush1.msra.mxu0 0.0
      %1310 = vmatprep.subr.mxu0 0.0
      %1311 = vmatpush1.msra.mxu0 0.0
      %1312 = vmatprep.subr.mxu0 0.0
      %1313 = vmatpush1.msra.mxu0 0.0
      %1314 = vmatprep.subr.mxu0 0.0
      %1315 = vmatpush1.msra.mxu0 0.0
      %1316 = vmatprep.subr.mxu0 0.0
      %1317 = vmatpush1.msra.mxu0 0.0
      %1318 = vmatprep.subr.mxu0 0.0
      %1319 = vmatpush1.msra.mxu0 0.0
      %1320 = vmatprep.subr.mxu0 0.0
      %1321 = vmatpush1.msra.mxu0 0.0
      %1322 = vmatprep.subr.mxu0 0.0
      %1323 = vmatpush1.msra.mxu0 0.0
      %1324 = vmatprep.subr.mxu0 0.0
      %1325 = vmatpush1.msra.mxu0 0.0
      %1326 = vmatprep.subr.mxu0 0.0
      %1327 = vmatpush1.msra.mxu0 0.0
      %1328 = vmatprep.subr.mxu0 0.0
      %1329 = vmatpush1.msra.mxu0 0.0
      %1330 = vmatprep.subr.mxu0 0.0
      %1331 = vmatpush1.msra.mxu0 0.0
      %1332 = vmatprep.subr.mxu0 0.0
      %1333 = vmatpush1.msra.mxu0 0.0
      %1334 = vmatprep.subr.mxu0 0.0
      %1335 = vmatpush1.msra.mxu0 0.0
      %1336 = vmatprep.subr.mxu0 0.0
      %1337 = vmatpush1.msra.mxu0 0.0
      %1338 = vmatprep.subr.mxu0 0.0
      %1339 = vmatpush1.msra.mxu0 0.0
      %1340 = vmatprep.subr.mxu0 0.0
      %1341 = vmatpush1.msra.mxu0 0.0
      %1342 = vmatprep.subr.mxu0 0.0
      %1343 = vmatpush1.msra.mxu0 0.0
      %1344 = vmatprep.subr.mxu0 0.0
      %1345 = vmatpush1.msra.mxu0 0.0
      %1346 = vmatprep.subr.mxu0 0.0
      %1347 = vmatpush1.msra.mxu0 0.0
      %1348 = vmatprep.subr.mxu0 0.0
      %1349 = vmatpush1.msra.mxu0 0.0
      %1350 = vmatprep.subr.mxu0 0.0
      %1351 = vmatpush1.msra.mxu0 0.0
      %1352 = vmatprep.subr.mxu0 0.0
      %1353 = vmatpush1.msra.mxu0 0.0
      %1354 = vmatprep.subr.mxu0 0.0
      %1355 = vmatpush1.msra.mxu0 0.0
      %1356 = vmatprep.subr.mxu0 0.0
      %1357 = vmatpush1.msra.mxu0 0.0
      %1358 = vmatprep.subr.mxu0 0.0
      %1359 = vmatpush1.msra.mxu0 0.0
      %1360 = vmatprep.subr.mxu0 0.0
      %1361 = vmatpush1.msra.mxu0 0.0
      %1362 = vmatprep.subr.mxu0 0.0
      %1363 = vmatpush1.msra.mxu0 0.0
      %1364 = vmatprep.mubr.f32.mxu0 0.0
      %1365 = vmatmul.mubr.f32.gmra.mrb[0].mxu0 %v1298
      %v1366 = vpop.f32.mrb[0].mxu0
      %v1367 = vadd.f32 0.0, %v1366
      %v1368 = vpop.f32.mrb[0].mxu0
      %v1369 = vadd.f32 0.0, %v1368
      %1370 = vdwg.mxu0
      %1371 = vmatprep.subr.mxu0 0.0
      %1372 = vmatpush1.msra.mxu0 %v1276
      %1373 = vmatprep.subr.mxu0 0.0
      %1374 = vmatpush1.msra.mxu0 %v1285
      %1375 = vmatprep.subr.mxu0 0.0
      %1376 = vmatpush1.msra.mxu0 %v1294
      %1377 = vmatprep.subr.mxu0 0.0
      %1378 = vmatpush1.msra.mxu0 0.0
      %1379 = vmatprep.subr.mxu0 0.0
      %1380 = vmatpush1.msra.mxu0 0.0
      %1381 = vmatprep.subr.mxu0 0.0
      %1382 = vmatpush1.msra.mxu0 0.0
      %1383 = vmatprep.subr.mxu0 0.0
      %1384 = vmatpush1.msra.mxu0 0.0
      %1385 = vmatprep.subr.mxu0 0.0
      %1386 = vmatpush1.msra.mxu0 0.0
      %1387 = vmatprep.subr.mxu0 0.0
      %1388 = vmatpush1.msra.mxu0 0.0
      %1389 = vmatprep.subr.mxu0 0.0
      %1390 = vmatpush1.msra.mxu0 0.0
      %1391 = vmatprep.subr.mxu0 0.0
      %1392 = vmatpush1.msra.mxu0 0.0
      %1393 = vmatprep.subr.mxu0 0.0
      %1394 = vmatpush1.msra.mxu0 0.0
      %1395 = vmatprep.subr.mxu0 0.0
      %1396 = vmatpush1.msra.mxu0 0.0
      %1397 = vmatprep.subr.mxu0 0.0
      %1398 = vmatpush1.msra.mxu0 0.0
      %1399 = vmatprep.subr.mxu0 0.0
      %1400 = vmatpush1.msra.mxu0 0.0
      %1401 = vmatprep.subr.mxu0 0.0
      %1402 = vmatpush1.msra.mxu0 0.0
      %1403 = vmatprep.subr.mxu0 0.0
      %1404 = vmatpush1.msra.mxu0 0.0
      %1405 = vmatprep.subr.mxu0 0.0
      %1406 = vmatpush1.msra.mxu0 0.0
      %1407 = vmatprep.subr.mxu0 0.0
      %1408 = vmatpush1.msra.mxu0 0.0
      %1409 = vmatprep.subr.mxu0 0.0
      %1410 = vmatpush1.msra.mxu0 0.0
      %1411 = vmatprep.subr.mxu0 0.0
      %1412 = vmatpush1.msra.mxu0 0.0
      %1413 = vmatprep.subr.mxu0 0.0
      %1414 = vmatpush1.msra.mxu0 0.0
      %1415 = vmatprep.subr.mxu0 0.0
      %1416 = vmatpush1.msra.mxu0 0.0
      %1417 = vmatprep.subr.mxu0 0.0
      %1418 = vmatpush1.msra.mxu0 0.0
      %1419 = vmatprep.subr.mxu0 0.0
      %1420 = vmatpush1.msra.mxu0 0.0
      %1421 = vmatprep.subr.mxu0 0.0
      %1422 = vmatpush1.msra.mxu0 0.0
      %1423 = vmatprep.subr.mxu0 0.0
      %1424 = vmatpush1.msra.mxu0 0.0
      %1425 = vmatprep.subr.mxu0 0.0
      %1426 = vmatpush1.msra.mxu0 0.0
      %1427 = vmatprep.subr.mxu0 0.0
      %1428 = vmatpush1.msra.mxu0 0.0
      %1429 = vmatprep.subr.mxu0 0.0
      %1430 = vmatpush1.msra.mxu0 0.0
      %1431 = vmatprep.subr.mxu0 0.0
      %1432 = vmatpush1.msra.mxu0 0.0
      %1433 = vmatprep.subr.mxu0 0.0
      %1434 = vmatpush1.msra.mxu0 0.0
      %1435 = vmatprep.mubr.f32.mxu0 0.0
      %1436 = vmatmul.mubr.f32.gmra.mrb[0].mxu0 %v1298
      %v1437 = vpop.f32.mrb[0].mxu0
      %v1438 = vadd.f32 0.0, %v1437
      %v1439 = vpop.f32.mrb[0].mxu0
      %1440 = vdwg.mxu0
      %v1441 = vadd.f32 %v1194, %v1367
      %v1442 = vadd.f32 %v1196, %v1369
      %v1443 = vadd.f32 %v1265, %v1438
      %1445 = vset.pattern.permute.xlu0 0
      %1446 = vperm.xlu0 %1445, %v930
      %v1447 = vpop.permute.xlu0 %1446
      %v1449 = vmul.f32 %v1441, %v1447
      %v1450 = vmul.f32 %v1442, %v1447
      %v1451 = vmul.f32 %v1443, %v1447
      %1453 = vset.pattern.permute.xlu0 0
      %1454 = vperm.xlu0 %1453, %v931
      %v1455 = vpop.permute.xlu0 %1454
      %v1457 = vadd.f32 %v1449, %v1455
      %v1458 = vadd.f32 %v1450, %v1455
      %v1459 = vadd.f32 %v1451, %v1455
      %v1460 = vmax.f32 %v1457, 0.0
      %v1461 = vmax.f32 %v1458, 0.0
      %v1462 = vmax.f32 %v1459, 0.0
      %v1463 = vmul.f32 %v1460, %v915
      %v1464 = vmul.f32 %v1461, %v919
      %v1465 = vmul.f32 %v1462, %v923
      %v1466 = vld [vmem:[%s7] sm:$0xff]
      %v1467 = vld [vmem:[%s8] sm:$0xff]
      %1469 = vset.pattern.permute.xlu0 0
      %1470 = vperm.xlu0 %1469, %v1467
      %v1471 = vpop.permute.xlu0 %1470
      %vm1473 = vcmask 64512
      %v1475 = vsel %vm1473, %v1466, 0
      %1477 = vmatprep.subr.mxu0 %v1464
      %1478 = vmatpush1.msra.mxu0 %v1463
      %1479 = vmatprep.subr.mxu0 0.0
      %1480 = vmatpush1.msra.mxu0 0.0
      %1481 = vmatprep.subr.mxu0 0.0
      %1482 = vmatpush1.msra.mxu0 0.0
      %1483 = vmatprep.subr.mxu0 0.0
      %1484 = vmatpush1.msra.mxu0 0.0
      %1485 = vmatprep.subr.mxu0 0.0
      %1486 = vmatpush1.msra.mxu0 0.0
      %1487 = vmatprep.subr.mxu0 0.0
      %1488 = vmatpush1.msra.mxu0 0.0
      %1489 = vmatprep.subr.mxu0 0.0
      %1490 = vmatpush1.msra.mxu0 0.0
      %1491 = vmatprep.subr.mxu0 0.0
      %1492 = vmatpush1.msra.mxu0 0.0
      %1493 = vmatprep.subr.mxu0 0.0
      %1494 = vmatpush1.msra.mxu0 0.0
      %1495 = vmatprep.subr.mxu0 0.0
      %1496 = vmatpush1.msra.mxu0 0.0
      %1497 = vmatprep.subr.mxu0 0.0
      %1498 = vmatpush1.msra.mxu0 0.0
      %1499 = vmatprep.subr.mxu0 0.0
      %1500 = vmatpush1.msra.mxu0 0.0
      %1501 = vmatprep.subr.mxu0 0.0
      %1502 = vmatpush1.msra.mxu0 0.0
      %1503 = vmatprep.subr.mxu0 0.0
      %1504 = vmatpush1.msra.mxu0 0.0
      %1505 = vmatprep.subr.mxu0 0.0
      %1506 = vmatpush1.msra.mxu0 0.0
      %1507 = vmatprep.subr.mxu0 0.0
      %1508 = vmatpush1.msra.mxu0 0.0
      %1509 = vmatprep.subr.mxu0 0.0
      %1510 = vmatpush1.msra.mxu0 0.0
      %1511 = vmatprep.subr.mxu0 0.0
      %1512 = vmatpush1.msra.mxu0 0.0
      %1513 = vmatprep.subr.mxu0 0.0
      %1514 = vmatpush1.msra.mxu0 0.0
      %1515 = vmatprep.subr.mxu0 0.0
      %1516 = vmatpush1.msra.mxu0 0.0
      %1517 = vmatprep.subr.mxu0 0.0
      %1518 = vmatpush1.msra.mxu0 0.0
      %1519 = vmatprep.subr.mxu0 0.0
      %1520 = vmatpush1.msra.mxu0 0.0
      %1521 = vmatprep.subr.mxu0 0.0
      %1522 = vmatpush1.msra.mxu0 0.0
      %1523 = vmatprep.subr.mxu0 0.0
      %1524 = vmatpush1.msra.mxu0 0.0
      %1525 = vmatprep.subr.mxu0 0.0
      %1526 = vmatpush1.msra.mxu0 0.0
      %1527 = vmatprep.subr.mxu0 0.0
      %1528 = vmatpush1.msra.mxu0 0.0
      %1529 = vmatprep.subr.mxu0 0.0
      %1530 = vmatpush1.msra.mxu0 0.0
      %1531 = vmatprep.subr.mxu0 0.0
      %1532 = vmatpush1.msra.mxu0 0.0
      %1533 = vmatprep.subr.mxu0 0.0
      %1534 = vmatpush1.msra.mxu0 0.0
      %1535 = vmatprep.subr.mxu0 0.0
      %1536 = vmatpush1.msra.mxu0 0.0
      %1537 = vmatprep.subr.mxu0 0.0
      %1538 = vmatpush1.msra.mxu0 0.0
      %1539 = vmatprep.subr.mxu0 0.0
      %1540 = vmatpush1.msra.mxu0 0.0
      %1541 = vmatprep.mubr.f32.mxu0 0.0
      %1542 = vmatmul.mubr.f32.gmra.mrb[0].mxu0 %v1475
      %v1543 = vpop.f32.mrb[0].mxu0
      %v1544 = vadd.f32 %v1471, %v1543
      %v1545 = vpop.f32.mrb[0].mxu0
      %v1546 = vadd.f32 %v1471, %v1545
      %1547 = vdwg.mxu0
      %1548 = vmatprep.subr.mxu0 0.0
      %1549 = vmatpush1.msra.mxu0 %v1465
      %1550 = vmatprep.subr.mxu0 0.0
      %1551 = vmatpush1.msra.mxu0 0.0
      %1552 = vmatprep.subr.mxu0 0.0
      %1553 = vmatpush1.msra.mxu0 0.0
      %1554 = vmatprep.subr.mxu0 0.0
      %1555 = vmatpush1.msra.mxu0 0.0
      %1556 = vmatprep.subr.mxu0 0.0
      %1557 = vmatpush1.msra.mxu0 0.0
      %1558 = vmatprep.subr.mxu0 0.0
      %1559 = vmatpush1.msra.mxu0 0.0
      %1560 = vmatprep.subr.mxu0 0.0
      %1561 = vmatpush1.msra.mxu0 0.0
      %1562 = vmatprep.subr.mxu0 0.0
      %1563 = vmatpush1.msra.mxu0 0.0
      %1564 = vmatprep.subr.mxu0 0.0
      %1565 = vmatpush1.msra.mxu0 0.0
      %1566 = vmatprep.subr.mxu0 0.0
      %1567 = vmatpush1.msra.mxu0 0.0
      %1568 = vmatprep.subr.mxu0 0.0
      %1569 = vmatpush1.msra.mxu0 0.0
      %1570 = vmatprep.subr.mxu0 0.0
      %1571 = vmatpush1.msra.mxu0 0.0
      %1572 = vmatprep.subr.mxu0 0.0
      %1573 = vmatpush1.msra.mxu0 0.0
      %1574 = vmatprep.subr.mxu0 0.0
      %1575 = vmatpush1.msra.mxu0 0.0
      %1576 = vmatprep.subr.mxu0 0.0
      %1577 = vmatpush1.msra.mxu0 0.0
      %1578 = vmatprep.subr.mxu0 0.0
      %1579 = vmatpush1.msra.mxu0 0.0
      %1580 = vmatprep.subr.mxu0 0.0
      %1581 = vmatpush1.msra.mxu0 0.0
      %1582 = vmatprep.subr.mxu0 0.0
      %1583 = vmatpush1.msra.mxu0 0.0
      %1584 = vmatprep.subr.mxu0 0.0
      %1585 = vmatpush1.msra.mxu0 0.0
      %1586 = vmatprep.subr.mxu0 0.0
      %1587 = vmatpush1.msra.mxu0 0.0
      %1588 = vmatprep.subr.mxu0 0.0
      %1589 = vmatpush1.msra.mxu0 0.0
      %1590 = vmatprep.subr.mxu0 0.0
      %1591 = vmatpush1.msra.mxu0 0.0
      %1592 = vmatprep.subr.mxu0 0.0
      %1593 = vmatpush1.msra.mxu0 0.0
      %1594 = vmatprep.subr.mxu0 0.0
      %1595 = vmatpush1.msra.mxu0 0.0
      %1596 = vmatprep.subr.mxu0 0.0
      %1597 = vmatpush1.msra.mxu0 0.0
      %1598 = vmatprep.subr.mxu0 0.0
      %1599 = vmatpush1.msra.mxu0 0.0
      %1600 = vmatprep.subr.mxu0 0.0
      %1601 = vmatpush1.msra.mxu0 0.0
      %1602 = vmatprep.subr.mxu0 0.0
      %1603 = vmatpush1.msra.mxu0 0.0
      %1604 = vmatprep.subr.mxu0 0.0
      %1605 = vmatpush1.msra.mxu0 0.0
      %1606 = vmatprep.subr.mxu0 0.0
      %1607 = vmatpush1.msra.mxu0 0.0
      %1608 = vmatprep.subr.mxu0 0.0
      %1609 = vmatpush1.msra.mxu0 0.0
      %1610 = vmatprep.subr.mxu0 0.0
      %1611 = vmatpush1.msra.mxu0 0.0
      %1612 = vmatprep.mubr.f32.mxu0 0.0
      %1613 = vmatmul.mubr.f32.gmra.mrb[0].mxu0 %v1475
      %v1614 = vpop.f32.mrb[0].mxu0
      %v1615 = vadd.f32 %v1471, %v1614
      %v1616 = vpop.f32.mrb[0].mxu0
      %1617 = vdwg.mxu0
      %1618 = vst [vmem:[%s361] sm:$0xff] %v1544
      %1619 = vst [vmem:[%s361 + $0x8] sm:$0xff] %v1546
      %1620 = vst [vmem:[%s361 + $0x10] sm:$0xff] %v1615
      %s1621 = smul.u32 3, %s21
      %p1622 = scmp.lt.s32.totalorder %s1621, 5
      %s1623 = scalar_select %p1622, %s1621, 5
      %s1624 = smul.addr %s1623, 8
      %s1625 = scalar_lea.vmem %s10, %s1624
      // Predicated region
      $region61: #{merged_head_forward.1} parent=59 // pred_check
        %p1626 = pneg %p254
      $region62: #{merged_head_forward.1} parent=59 // pred_check_branch
        %1628 = sbr.rel (%p1626) target = $region64
      $region63: #{merged_head_forward.1} parent=59 // pred_region
        %s1629 = smul.u32 3, %s21
      $region64: #{merged_head_forward.1} parent=59 // pred_fallthru
        _
    $region60: #{merged_head_forward.1} parent=5 // pred_fallthru
      _
    %p1630 = scmp.le.s32.totalorder 2, %s16
    // Predicated region
    $region65: #{merged_head_forward.1} parent=5 // pred_check
      %p1631 = pneg %p1630
    $region66: #{merged_head_forward.1} parent=5 // pred_check_branch
      %1633 = sbr.rel (%p1631) target = $region68
    $region67: #{merged_head_forward.1} parent=5 // pred_region
      %s1634 = ssub.s32 %s16, 2
      // Predicated region
      $region69: #{merged_head_forward.1} parent=67 // pred_check
        %p1635 = pneg %p260
      $region70: #{merged_head_forward.1} parent=67 // pred_check_branch
        %1637 = sbr.rel (%p1635) target = $region72
      $region71: #{merged_head_forward.1} parent=67 // pred_region
        %s1638 = smul.u32 3, %s22
        %p1639 = scmp.lt.s32.totalorder %s1638, 5
        %s1640 = scalar_select %p1639, %s1638, 5
        %s1641 = smul.addr %s1640, 8
        %s1642 = scalar_lea.vmem %s10, %s1641
      $region72: #{merged_head_forward.1} parent=67 // pred_fallthru
        _
    $region68: #{merged_head_forward.1} parent=5 // pred_fallthru
      _
  $region6: #{merged_head_forward.1} parent=0 // loop_footer
    %s20 = sadd.s32 1, %s16
  $region7: #{merged_head_forward.1} parent=0 // loop_footer_branch
    %15 = sbr.rel target = $region3
  $region8: #{merged_head_forward.1} parent=0 // loop_exit
    _

</llo_original>
